<compile_context>
chip_gen: v6e
topology: v6e:2x2x1
jax: 0.10.0
libtpu: 0.0.40
codegen_flags: <defaults>
</compile_context>

<pallas_src>
import math

import jax
import jax.numpy as jnp
from jax.experimental import pallas as pl
from jax.experimental.pallas import tpu as pltpu


def _round_up(x, m):
    return ((x + m - 1) // m) * m


def _pad2(x, rows, cols):
    return jnp.pad(x, ((0, rows - x.shape[0]), (0, cols - x.shape[1])))


def _vmem_capacity_bytes():
    """Physical per-core VMEM (generation-aware); conservative fallback."""
    try:
        info = pltpu.get_tpu_info()
        cap = getattr(info, "vmem_capacity_bytes", None)
        if cap:
            return int(cap)
    except Exception:
        pass
    return 64 * 1024 * 1024   # v7x per-TC VMEM = smallest of v5e/v6e/v7x


# --------------------------------------------------------------------------
# Kernel 1: matrix-GRU weight evolution + xw[t] = X[t] @ Q[t]
#   grid = (T,)  -- sequential carry on Q held in a VMEM scratch
# --------------------------------------------------------------------------
def _evolve_xw_kernel(wg_ref, uh_ref, bg_ref, q0_ref, x_ref, xw_ref, q_ref):
    t = pl.program_id(0)

    @pl.when(t == 0)
    def _():
        q_ref[...] = q0_ref[...]

    q = q_ref[...]
    fp = q_ref.shape[0]          # padded F_in (static)

    # One stacked matmul: [(Wu+Uu); (Wr+Ur); Wh] @ Q + stacked biases (f32).
    gates = jnp.dot(wg_ref[...], q,
                    preferred_element_type=jnp.float32) + bg_ref[...]
    update = jax.nn.sigmoid(gates[:fp, :])
    reset = jax.nn.sigmoid(gates[fp:2 * fp, :])
    h_cap = jnp.tanh(
        gates[2 * fp:, :]
        + jnp.dot(uh_ref[...], reset * q, preferred_element_type=jnp.float32))
    new_q = (1.0 - update) * q + update * h_cap
    q_ref[...] = new_q

    # xw[t] = X[t] @ new_Q  (bf16 operands, f32 accumulate, bf16 store).
    xw_ref[...] = jnp.dot(
        x_ref[...], new_q.astype(jnp.bfloat16),
        preferred_element_type=jnp.float32).astype(xw_ref.dtype)


# --------------------------------------------------------------------------
# Kernel 2 (hot): out[t, tile] = relu(A[t, tile] @ xw[t])
#   grid = (T, R)  -- both axes parallel (megacore-friendly on v7x)
# --------------------------------------------------------------------------
def _gcn_kernel(a_ref, xw_ref, out_ref):
    out_ref[...] = jnp.maximum(
        jnp.dot(a_ref[...], xw_ref[...], preferred_element_type=jnp.float32),
        0.0).astype(out_ref.dtype)


# --------------------------------------------------------------------------
# One GRCU layer over the padded sequence
# --------------------------------------------------------------------------
def grcu_layer(A_p, X_p, p, f_in, f_out):
    """A_p: (T, N_p, N_p) bf16; X_p: (T, N_p, F_in_p) bf16 (zero-padded).
    Returns (T, N_p, F_out_p) bf16 (zero padding preserved)."""
    T, n_p, _ = A_p.shape
    f_in_p = _round_up(f_in, 128)
    f_out_p = _round_up(f_out, 128)
    assert X_p.shape == (T, n_p, f_in_p), X_p.shape
    assert A_p.dtype == jnp.bfloat16 and X_p.dtype == jnp.bfloat16

    # Fuse W@Q + U@Q -> (W+U)@Q and stack the three gates (f32, padded).
    wg = jnp.concatenate([
        _pad2(p["Wu"] + p["Uu"], f_in_p, f_in_p),
        _pad2(p["Wr"] + p["Ur"], f_in_p, f_in_p),
        _pad2(p["Wh"], f_in_p, f_in_p),
    ], axis=0)                                        # (3*F_in_p, F_in_p)
    bg = jnp.concatenate([
        _pad2(p["bu"], f_in_p, f_out_p),
        _pad2(p["br"], f_in_p, f_out_p),
        _pad2(p["bh"], f_in_p, f_out_p),
    ], axis=0)                                        # (3*F_in_p, F_out_p)
    uh = _pad2(p["Uh"], f_in_p, f_in_p)               # (F_in_p, F_in_p)
    q0 = _pad2(p["gcn_init"], f_in_p, f_out_p)        # (F_in_p, F_out_p)

    cap = _vmem_capacity_bytes()

    # ---- (1) evolve Q across time & compute xw ---------------------------
    need1 = int(2 * 4 * (wg.size + uh.size + bg.size + q0.size)  # f32 weights
                + 2 * 2 * n_p * f_in_p                           # X (bf16, dbl-buf)
                + 2 * 2 * n_p * f_out_p                          # xw out
                + 4 * f_in_p * f_out_p)                          # Q scratch
    vmem1 = int(max(16 << 20, min(cap - (8 << 20), need1 * 2 + (4 << 20))))

    cost1 = pl.CostEstimate(
        flops=int(T * (2 * 3 * f_in_p * f_in_p * f_out_p          # stacked gates
                       + 2 * f_in_p * f_in_p * f_out_p            # Uh @ (r*Q)
                       + 2 * n_p * f_in_p * f_out_p)),            # X @ Q
        transcendentals=int(T * 3 * f_in_p * f_out_p),
        bytes_accessed=int(4 * (wg.size + uh.size + bg.size + q0.size)
                           + 2 * T * n_p * (f_in_p + f_out_p)),
    )

    # TODO(synk): the constant-index weight inputs could use
    # pipeline_mode=pl.Buffered(1) to drop their dead second VMEM buffer;
    # skipped here since the weight footprint is tiny at these feature sizes.
    xw = pl.pallas_call(
        _evolve_xw_kernel,
        out_shape=jax.ShapeDtypeStruct((T, n_p, f_out_p), jnp.bfloat16),
        grid=(T,),
        in_specs=[
            # time-invariant weights: constant block index -> VMEM-resident
            pl.BlockSpec((3 * f_in_p, f_in_p), lambda t: (0, 0)),
            pl.BlockSpec((f_in_p, f_in_p), lambda t: (0, 0)),
            pl.BlockSpec((3 * f_in_p, f_out_p), lambda t: (0, 0)),
            pl.BlockSpec((f_in_p, f_out_p), lambda t: (0, 0)),
            # per-timestep node embeddings (bf16), pipelined by BlockSpec
            pl.BlockSpec((None, n_p, f_in_p), lambda t: (t, 0, 0)),
        ],
        out_specs=pl.BlockSpec((None, n_p, f_out_p), lambda t: (t, 0, 0)),
        scratch_shapes=[pltpu.VMEM((f_in_p, f_out_p), jnp.float32)],  # Q carry
        compiler_params=pltpu.CompilerParams(
            dimension_semantics=("arbitrary",),      # sequential recurrence
            vmem_limit_bytes=vmem1),
        cost_estimate=cost1,
    )(wg, uh, bg, q0, X_p)

    # ---- (2) GCN: relu(A @ xw), both grid axes parallel -------------------
    budget = int(cap * 0.55)     # leave headroom for compiler internal scratch
    tm = 128
    for cand in (1024, 512, 256, 128):
        if cand <= n_p and n_p % cand == 0:
            need = (2 * 2 * cand * n_p            # A tile (bf16, double-buffered)
                    + 2 * 2 * n_p * f_out_p       # xw (bf16, double-buffered)
                    + 2 * 2 * cand * f_out_p)     # out tile
            if need <= budget:
                tm = cand
                break
    need2 = int(2 * 2 * tm * n_p + 2 * 2 * n_p * f_out_p
                + 2 * 2 * tm * f_out_p)
    vmem2 = int(max(16 << 20, min(cap - (8 << 20), need2 * 2 + (4 << 20))))

    cost2 = pl.CostEstimate(
        flops=int(T * 2 * n_p * n_p * f_out_p),
        transcendentals=0,
        bytes_accessed=int(2 * T * (n_p * n_p + 2 * n_p * f_out_p)),
    )

    # TODO(synk): for very large graphs add a K (contraction) grid axis so the
    # A working set is bounded by tm*tk instead of tm*n_p (v7x 64 MiB VMEM).
    out = pl.pallas_call(
        _gcn_kernel,
        out_shape=jax.ShapeDtypeStruct((T, n_p, f_out_p), jnp.bfloat16),
        grid=(T, n_p // tm),
        in_specs=[
            pl.BlockSpec((None, tm, n_p), lambda t, r: (t, r, 0)),       # A
            pl.BlockSpec((None, n_p, f_out_p), lambda t, r: (t, 0, 0)),  # xw
        ],
        out_specs=pl.BlockSpec((None, tm, f_out_p), lambda t, r: (t, r, 0)),
        compiler_params=pltpu.CompilerParams(
            dimension_semantics=("parallel", "parallel"),
            vmem_limit_bytes=vmem2),
        cost_estimate=cost2,
    )(A_p, xw)
    return out


# --------------------------------------------------------------------------
# Parameter init (matches PyTorch reset_param: uniform(-stdv, stdv))
# --------------------------------------------------------------------------
def init_grcu_params(key, f_in, f_out):
    ks = jax.random.split(key, 7)
    stdv_g = 1.0 / math.sqrt(f_in)   # gate W/U: (f_in, f_in), stdv = 1/sqrt(size(1))
    stdv_w = 1.0 / math.sqrt(f_out)  # GCN_init_weights: (f_in, f_out)
    u = lambda k, shape, s: jax.random.uniform(
        k, shape, dtype=jnp.float32, minval=-s, maxval=s)
    return {
        "Wu": u(ks[0], (f_in, f_in), stdv_g),
        "Uu": u(ks[1], (f_in, f_in), stdv_g),
        "bu": jnp.zeros((f_in, f_out), jnp.float32),
        "Wr": u(ks[2], (f_in, f_in), stdv_g),
        "Ur": u(ks[3], (f_in, f_in), stdv_g),
        "br": jnp.zeros((f_in, f_out), jnp.float32),
        "Wh": u(ks[4], (f_in, f_in), stdv_g),
        "Uh": u(ks[5], (f_in, f_in), stdv_g),
        "bh": jnp.zeros((f_in, f_out), jnp.float32),
        "gcn_init": u(ks[6], (f_in, f_out), stdv_w),
    }


# --------------------------------------------------------------------------
# EGCN forward: pad + bf16-cast once, chain the per-layer Pallas calls,
# slice & upcast at the end
# --------------------------------------------------------------------------
def egcn_forward(A_seq, X_seq, layer_params, feat_dims):
    """A_seq: (T, N, N); X_seq: (T, N, feat_dims[0]); returns (T, N, feat_dims[-1])."""
    T, N, _ = A_seq.shape
    n_p = _round_up(N, 128)
    f0_p = _round_up(feat_dims[0], 128)
    A_p = jnp.pad(A_seq, ((0, 0), (0, n_p - N),
                          (0, n_p - N))).astype(jnp.bfloat16)
    nodes = jnp.pad(X_seq, ((0, 0), (0, n_p - N),
                            (0, f0_p - feat_dims[0]))).astype(jnp.bfloat16)
    for li, p in enumerate(layer_params):
        nodes = grcu_layer(A_p, nodes, p, feat_dims[li], feat_dims[li + 1])
    return nodes[:, :N, :feat_dims[-1]].astype(jnp.float32)


# --------------------------------------------------------------------------
# Pure-JAX f32 reference (unfused, unpadded) for correctness check
# --------------------------------------------------------------------------
def egcn_forward_ref(A_seq, X_seq, layer_params):
    nodes = X_seq
    for p in layer_params:
        Q = p["gcn_init"]
        outs = []
        for t in range(A_seq.shape[0]):
            update = jax.nn.sigmoid(p["Wu"] @ Q + p["Uu"] @ Q + p["bu"])
            reset = jax.nn.sigmoid(p["Wr"] @ Q + p["Ur"] @ Q + p["br"])
            h_cap = jnp.tanh(p["Wh"] @ Q + p["Uh"] @ (reset * Q) + p["bh"])
            Q = (1.0 - update) * Q + update * h_cap
            outs.append(jnp.maximum(A_seq[t] @ (nodes[t] @ Q), 0.0))
        nodes = jnp.stack(outs, axis=0)
    return nodes


if __name__ == "__main__":
    key = jax.random.PRNGKey(0)
    k_a, k_x, k_p1, k_p2 = jax.random.split(key, 4)

    # small, module-consistent shapes
    T = 4                      # number of graph snapshots (len(A_list))
    N = 16                     # nodes per snapshot
    F0, F1, F2 = 8, 16, 32     # feats_per_node, layer_1_feats, layer_2_feats

    # deterministic inputs: row-normalized adjacency with self-loops, random feats
    raw = jax.random.uniform(k_a, (T, N, N), dtype=jnp.float32)
    adj = raw + jnp.eye(N, dtype=jnp.float32)[None]
    A_seq = adj / jnp.sum(adj, axis=-1, keepdims=True)
    X_seq = jax.random.normal(k_x, (T, N, F0), dtype=jnp.float32)

    layer_params = [init_grcu_params(k_p1, F0, F1),
                    init_grcu_params(k_p2, F1, F2)]

    out = jax.block_until_ready(
        egcn_forward(A_seq, X_seq, layer_params, (F0, F1, F2)))
    ref = jax.block_until_ready(egcn_forward_ref(A_seq, X_seq, layer_params))

    assert out.shape == (T, N, F2), out.shape
    # The GCN matmuls (A, X, xw, intermediates) run in bf16 with f32
    # accumulation, so the comparison against the pure-f32 reference uses a
    # bf16-appropriate tolerance (GRU weight evolution stays f32).
    err = float(jnp.max(jnp.abs(out - ref)))
    assert jnp.allclose(out, ref, atol=1e-2, rtol=5e-2), err

    print("KERNEL_OK")
</pallas_src>

<mosaic_0001>
module attributes {stable_mosaic.version = 11 : i64} {
  func.func @_evolve_xw_kernel(%arg0: i32, %arg1: memref<384x128xf32, #tpu.memory_space<vmem>>, %arg2: memref<128x128xf32, #tpu.memory_space<vmem>>, %arg3: memref<384x128xf32, #tpu.memory_space<vmem>>, %arg4: memref<128x128xf32, #tpu.memory_space<vmem>>, %arg5: memref<1x128x128xbf16, #tpu.memory_space<vmem>>, %arg6: memref<1x128x128xbf16, #tpu.memory_space<vmem>>, %arg7: memref<128x128xf32, #tpu.memory_space<vmem>>) attributes {dimension_semantics = [#tpu.dimension_semantics<arbitrary>], iteration_bounds = array<i64: 4>, scalar_prefetch = 0 : i64, scratch_operands = 1 : i64, tpu.core_type = #tpu.core_type<tc>, window_params = [{pipeline_mode = #tpu.pipeline_mode<synchronous>, transform_indices = @transform_0, window_bounds = array<i64: 384, 128>}, {pipeline_mode = #tpu.pipeline_mode<synchronous>, transform_indices = @transform_1, window_bounds = array<i64: 128, 128>}, {pipeline_mode = #tpu.pipeline_mode<synchronous>, transform_indices = @transform_2, window_bounds = array<i64: 384, 128>}, {pipeline_mode = #tpu.pipeline_mode<synchronous>, transform_indices = @transform_3, window_bounds = array<i64: 128, 128>}, {transform_indices = @transform_4, window_bounds = array<i64: 1, 128, 128>}, {transform_indices = @transform_5, window_bounds = array<i64: 1, 128, 128>}]} {
    %c0_i32 = arith.constant 0 : i32
    %0 = arith.cmpi eq, %arg0, %c0_i32 : i32
    %1 = arith.extui %0 : i1 to i32
    %c0_i32_0 = arith.constant 0 : i32
    %2 = arith.cmpi ne, %1, %c0_i32_0 : i32
    scf.if %2 {
      %c0_21 = arith.constant 0 : index
      %c0_22 = arith.constant 0 : index
      %40 = vector.load %arg4[%c0_21, %c0_22] : memref<128x128xf32, #tpu.memory_space<vmem>>, vector<128x128xf32>
      %c0_23 = arith.constant 0 : index
      %c0_24 = arith.constant 0 : index
      %41 = vector.load %arg7[%c0_23, %c0_24] : memref<128x128xf32, #tpu.memory_space<vmem>>, vector<128x128xf32>
      tpu.vector_store %arg7[%c0_23, %c0_24], %40 {strides = array<i32>} : memref<128x128xf32, #tpu.memory_space<vmem>>, vector<128x128xf32>,
    } else {
    }
    %c0 = arith.constant 0 : index
    %c0_1 = arith.constant 0 : index
    %3 = vector.load %arg7[%c0, %c0_1] : memref<128x128xf32, #tpu.memory_space<vmem>>, vector<128x128xf32>
    %c0_2 = arith.constant 0 : index
    %c0_3 = arith.constant 0 : index
    %4 = vector.load %arg1[%c0_2, %c0_3] : memref<384x128xf32, #tpu.memory_space<vmem>>, vector<384x128xf32>
    %cst = arith.constant dense<0.000000e+00> : vector<384x128xf32>
    %5 = tpu.matmul %4, %3, %cst {dimension_numbers = #tpu.dot_dimension_numbers<[1], [0], [0], [1], [0, 0, 1, 1], [], []>} : vector<384x128xf32>, vector<128x128xf32>, vector<384x128xf32> -> vector<384x128xf32>
    %c0_4 = arith.constant 0 : index
    %c0_5 = arith.constant 0 : index
    %6 = vector.load %arg3[%c0_4, %c0_5] : memref<384x128xf32, #tpu.memory_space<vmem>>, vector<384x128xf32>
    %7 = arith.addf %5, %6 : vector<384x128xf32>
    %8 = vector.extract_strided_slice %7 {offsets = [0, 0], sizes = [128, 128], strides = [1, 1]} : vector<384x128xf32> to vector<128x128xf32>
    %9 = arith.negf %8 : vector<128x128xf32>
    %10 = math.exp %9 : vector<128x128xf32>
    %cst_6 = arith.constant 1.000000e+00 : f32
    %11 = vector.broadcast %cst_6 : f32 to vector<128x128xf32>
    %12 = arith.addf %11, %10 : vector<128x128xf32>
    %13 = arith.divf %11, %12 : vector<128x128xf32>
    %14 = vector.extract_strided_slice %7 {offsets = [128, 0], sizes = [128, 128], strides = [1, 1]} : vector<384x128xf32> to vector<128x128xf32>
    %15 = arith.negf %14 : vector<128x128xf32>
    %16 = math.exp %15 : vector<128x128xf32>
    %cst_7 = arith.constant 1.000000e+00 : f32
    %17 = vector.broadcast %cst_7 : f32 to vector<128x128xf32>
    %18 = arith.addf %17, %16 : vector<128x128xf32>
    %19 = arith.divf %17, %18 : vector<128x128xf32>
    %20 = vector.extract_strided_slice %7 {offsets = [256, 0], sizes = [128, 128], strides = [1, 1]} : vector<384x128xf32> to vector<128x128xf32>
    %c0_8 = arith.constant 0 : index
    %c0_9 = arith.constant 0 : index
    %21 = vector.load %arg2[%c0_8, %c0_9] : memref<128x128xf32, #tpu.memory_space<vmem>>, vector<128x128xf32>
    %22 = arith.mulf %19, %3 : vector<128x128xf32>
    %cst_10 = arith.constant dense<0.000000e+00> : vector<128x128xf32>
    %23 = tpu.matmul %21, %22, %cst_10 {dimension_numbers = #tpu.dot_dimension_numbers<[1], [0], [0], [1], [0, 0, 1, 1], [], []>} : vector<128x128xf32>, vector<128x128xf32>, vector<128x128xf32> -> vector<128x128xf32>
    %24 = arith.addf %20, %23 : vector<128x128xf32>
    %25 = math.tanh %24 : vector<128x128xf32>
    %cst_11 = arith.constant 1.000000e+00 : f32
    %26 = vector.broadcast %cst_11 : f32 to vector<128x128xf32>
    %27 = arith.subf %26, %13 : vector<128x128xf32>
    %28 = arith.mulf %27, %3 : vector<128x128xf32>
    %29 = arith.mulf %13, %25 : vector<128x128xf32>
    %30 = arith.addf %28, %29 : vector<128x128xf32>
    %c0_12 = arith.constant 0 : index
    %c0_13 = arith.constant 0 : index
    %31 = vector.load %arg7[%c0_12, %c0_13] : memref<128x128xf32, #tpu.memory_space<vmem>>, vector<128x128xf32>
    tpu.vector_store %arg7[%c0_12, %c0_13], %30 {strides = array<i32>} : memref<128x128xf32, #tpu.memory_space<vmem>>, vector<128x128xf32>,
    %c0_14 = arith.constant 0 : index
    %c0_15 = arith.constant 0 : index
    %c0_16 = arith.constant 0 : index
    %32 = vector.load %arg5[%c0_14, %c0_15, %c0_16] : memref<1x128x128xbf16, #tpu.memory_space<vmem>>, vector<1x128x128xbf16>
    %33 = vector.shape_cast %32 : vector<1x128x128xbf16> to vector<128x128xbf16>
    %34 = arith.truncf %30 : vector<128x128xf32> to vector<128x128xbf16>
    %cst_17 = arith.constant dense<0.000000e+00> : vector<128x128xf32>
    %35 = tpu.matmul %33, %34, %cst_17 {dimension_numbers = #tpu.dot_dimension_numbers<[1], [0], [0], [1], [0, 0, 1, 1], [], []>} : vector<128x128xbf16>, vector<128x128xbf16>, vector<128x128xf32> -> vector<128x128xf32>
    %36 = arith.truncf %35 : vector<128x128xf32> to vector<128x128xbf16>
    %c0_18 = arith.constant 0 : index
    %c0_19 = arith.constant 0 : index
    %c0_20 = arith.constant 0 : index
    %37 = vector.load %arg6[%c0_18, %c0_19, %c0_20] : memref<1x128x128xbf16, #tpu.memory_space<vmem>>, vector<1x128x128xbf16>
    %38 = vector.shape_cast %37 : vector<1x128x128xbf16> to vector<128x128xbf16>
    %39 = vector.shape_cast %36 : vector<128x128xbf16> to vector<1x128x128xbf16>
    tpu.vector_store %arg6[%c0_18, %c0_19, %c0_20], %39 {strides = array<i32>} : memref<1x128x128xbf16, #tpu.memory_space<vmem>>, vector<1x128x128xbf16>,
    return
  }
  func.func @transform_0(%arg0: i32) -> (i32, i32) {
    %c0_i32 = arith.constant 0 : i32
    %c0_i32_0 = arith.constant 0 : i32
    %c0_i32_1 = arith.constant 0 : i32
    return %c0_i32, %c0_i32_0 : i32, i32
  }
  func.func @transform_1(%arg0: i32) -> (i32, i32) {
    %c0_i32 = arith.constant 0 : i32
    %c0_i32_0 = arith.constant 0 : i32
    %c0_i32_1 = arith.constant 0 : i32
    return %c0_i32, %c0_i32_0 : i32, i32
  }
  func.func @transform_2(%arg0: i32) -> (i32, i32) {
    %c0_i32 = arith.constant 0 : i32
    %c0_i32_0 = arith.constant 0 : i32
    %c0_i32_1 = arith.constant 0 : i32
    return %c0_i32, %c0_i32_0 : i32, i32
  }
  func.func @transform_3(%arg0: i32) -> (i32, i32) {
    %c0_i32 = arith.constant 0 : i32
    %c0_i32_0 = arith.constant 0 : i32
    %c0_i32_1 = arith.constant 0 : i32
    return %c0_i32, %c0_i32_0 : i32, i32
  }
  func.func @transform_4(%arg0: i32) -> (i32, i32, i32) {
    %c0_i32 = arith.constant 0 : i32
    %c0_i32_0 = arith.constant 0 : i32
    %c0_i32_1 = arith.constant 0 : i32
    return %arg0, %c0_i32, %c0_i32_0 : i32, i32, i32
  }
  func.func @transform_5(%arg0: i32) -> (i32, i32, i32) {
    %c0_i32 = arith.constant 0 : i32
    %c0_i32_0 = arith.constant 0 : i32
    %c0_i32_1 = arith.constant 0 : i32
    return %arg0, %c0_i32, %c0_i32_0 : i32, i32, i32
  }
}

</mosaic_0001>

<llo_original>
// kernel: tpu_custom_call.1
$region0: #{tpu_custom_call.1}
  #allocation0 [shape = 'u32[]', space=smem, size = 0x4, offset = 0x4, fixed_abs, tag = 'smem constant byte address 0x4 - core index']
  #allocation1 [shape = 'u32[144,128]{1,0:T(1,128)}', space=vmem, size = 0x12000, scoped, tag = 'internal scratch']
  #allocation2 [shape = 'f32[128,128]{1,0:T(8,128)}', space=vmem, size = 0x10000, scoped, tag = 'scratch operand']
  %s0 = inlined_call_operand.hbm [shape: f32[384,128], index: 0, kind: input, shape index: {}]
  %s1 = inlined_call_operand.hbm [shape: f32[128,128], index: 1, kind: input, shape index: {}]
  %s2 = inlined_call_operand.hbm [shape: f32[384,128], index: 2, kind: input, shape index: {}]
  %s3 = inlined_call_operand.hbm [shape: f32[128,128], index: 3, kind: input, shape index: {}]
  %s4 = inlined_call_operand.hbm [shape: bf16[4,128,128], index: 4, kind: input, shape index: {}]
  %s5 = inlined_call_operand.hbm [shape: bf16[4,128,128], index: 5, kind: output, shape index: {}]
  %s6 = sld [smem:[#allocation0]]
  $region77: #{tpu_custom_call.1} parent=0
    _
  %s8 = ssub.s32 1, %s6
  %s9 = scalar_select 0, %s8, %s6
  $region1: #{tpu_custom_call.1} parent=0
    #allocation3 [shape = 'u8[196608]{0}', space=vmem, size = 0x30000, scoped, tag = 'input window, operand 0, single buffered']
    #allocation4 [shape = 's32[2]{0}', space=sflag, size = 0x8, scoped, tag = 'scoped memory for tpu_custom_call.1']
    #allocation5 [shape = 's32[2]{0}', space=sflag, size = 0x8, scoped, tag = 'scoped memory for tpu_custom_call.1']
    #allocation6 [shape = 'u8[65536]{0}', space=vmem, size = 0x10000, scoped, tag = 'input window, operand 1, single buffered']
    #allocation7 [shape = 's32[1]{0}', space=sflag, size = 0x4, scoped, tag = 'scoped memory for tpu_custom_call.1']
    #allocation8 [shape = 'u8[196608]{0}', space=vmem, size = 0x30000, scoped, tag = 'input window, operand 2, single buffered']
    #allocation9 [shape = 'u8[65536]{0}', space=vmem, size = 0x10000, scoped, tag = 'input window, operand 3, single buffered']
    #allocation10 [shape = 's32[1]{0}', space=sflag, size = 0x4, scoped, tag = 'scoped memory for tpu_custom_call.1']
    #allocation11 [shape = 'u8[65536]{0}', space=vmem, size = 0x10000, scoped, tag = 'input window, operand 4']
    #allocation12 [shape = 'u8[65536]{0}', space=vmem, size = 0x10000, scoped, tag = 'output window, operand 0']
    %10 = vsyncpa [#allocation4], 0
    %11 = vsyncpa [#allocation7], 0
    %12 = vsyncpa [#allocation10], 0
    %13 = vsyncpa [#allocation5], 0
    %s14 = scalar_lea.sflag [#allocation5], 1
    %15 = vsyncpa %s14, 0
    loop: start=0, step=1, limit=6
    $region2: #{tpu_custom_call.1} parent=1 // loop_pre_header
      _
    $region3: #{tpu_custom_call.1} parent=1 // loop_header
      %s17 = sphi 0, %s21
      %p18 = scmp.ge.s32.totalorder %s17, 6
      %s25 = sphi 0, %s25
      %s27 = sphi 0, %s25
      %s28 = sphi 0, %s27
      %s42 = sphi 0, %s28
      %s46 = sphi 0, %s46
      %s48 = sphi 0, %s46
      %s49 = sphi 0, %s48
      %s63 = sphi 0, %s49
      %s67 = sphi 0, %s67
      %s69 = sphi 0, %s67
      %s70 = sphi 0, %s69
      %s84 = sphi 0, %s70
      %s88 = sphi 0, %s88
      %s90 = sphi 0, %s88
      %s91 = sphi 0, %s90
      %s105 = sphi 0, %s91
      %s111 = sphi 0, %s113
      %s114 = sphi 0, %s111
      %s115 = sphi 0, %s114
      %s131 = sphi 0, %s115
      %s137 = sphi 0, %s139
      %s140 = sphi 0, %s137
      %s141 = sphi 0, %s140
      %s157 = sphi 0, %s141
    $region4: #{tpu_custom_call.1} parent=1 // loop_header_branch
      %20 = sbr.rel (%p18) target = $region8
    $region5: #{tpu_custom_call.1} parent=1 // loop_body
      %s22 = ssub.s32 %s17, 1
      %s23 = ssub.s32 %s17, 2
      %s24 = sadd.s32 %s17, 1
      %s26 = sadd.s32 %s25, 1
      %p29 = scmp.eq.s32.totalorder %s17, 3
      %p30 = scmp.ne.s32.totalorder %s25, %s27
      %p31 = scmp.eq.s32.totalorder %s17, 0
      %p32 = por %p30, %p31
      %p33 = scmp.ne.s32.totalorder %s25, %s27
      %p34 = scmp.eq.s32.totalorder %s22, 3
      %p35 = por %p33, %p34
      %p36 = scmp.ne.s32.totalorder %s27, %s28
      %p37 = scmp.eq.s32.totalorder %s22, 0
      %p38 = por %p36, %p37
      %p39 = scmp.ne.s32.totalorder %s27, %s28
      %p40 = scmp.eq.s32.totalorder %s23, 3
      %p41 = por %p39, %p40
      %p43 = scmp.ne.s32.totalorder %s28, %s42
      %p44 = scmp.eq.s32.totalorder %s23, 0
      %p45 = por %p43, %p44
      %s47 = sadd.s32 %s46, 1
      %p50 = scmp.eq.s32.totalorder %s17, 3
      %p51 = scmp.ne.s32.totalorder %s46, %s48
      %p52 = scmp.eq.s32.totalorder %s17, 0
      %p53 = por %p51, %p52
      %p54 = scmp.ne.s32.totalorder %s46, %s48
      %p55 = scmp.eq.s32.totalorder %s22, 3
      %p56 = por %p54, %p55
      %p57 = scmp.ne.s32.totalorder %s48, %s49
      %p58 = scmp.eq.s32.totalorder %s22, 0
      %p59 = por %p57, %p58
      %p60 = scmp.ne.s32.totalorder %s48, %s49
      %p61 = scmp.eq.s32.totalorder %s23, 3
      %p62 = por %p60, %p61
      %p64 = scmp.ne.s32.totalorder %s49, %s63
      %p65 = scmp.eq.s32.totalorder %s23, 0
      %p66 = por %p64, %p65
      %s68 = sadd.s32 %s67, 1
      %p71 = scmp.eq.s32.totalorder %s17, 3
      %p72 = scmp.ne.s32.totalorder %s67, %s69
      %p73 = scmp.eq.s32.totalorder %s17, 0
      %p74 = por %p72, %p73
      %p75 = scmp.ne.s32.totalorder %s67, %s69
      %p76 = scmp.eq.s32.totalorder %s22, 3
      %p77 = por %p75, %p76
      %p78 = scmp.ne.s32.totalorder %s69, %s70
      %p79 = scmp.eq.s32.totalorder %s22, 0
      %p80 = por %p78, %p79
      %p81 = scmp.ne.s32.totalorder %s69, %s70
      %p82 = scmp.eq.s32.totalorder %s23, 3
      %p83 = por %p81, %p82
      %p85 = scmp.ne.s32.totalorder %s70, %s84
      %p86 = scmp.eq.s32.totalorder %s23, 0
      %p87 = por %p85, %p86
      %s89 = sadd.s32 %s88, 1
      %p92 = scmp.eq.s32.totalorder %s17, 3
      %p93 = scmp.ne.s32.totalorder %s88, %s90
      %p94 = scmp.eq.s32.totalorder %s17, 0
      %p95 = por %p93, %p94
      %p96 = scmp.ne.s32.totalorder %s88, %s90
      %p97 = scmp.eq.s32.totalorder %s22, 3
      %p98 = por %p96, %p97
      %p99 = scmp.ne.s32.totalorder %s90, %s91
      %p100 = scmp.eq.s32.totalorder %s22, 0
      %p101 = por %p99, %p100
      %p102 = scmp.ne.s32.totalorder %s90, %s91
      %p103 = scmp.eq.s32.totalorder %s23, 3
      %p104 = por %p102, %p103
      %p106 = scmp.ne.s32.totalorder %s91, %s105
      %p107 = scmp.eq.s32.totalorder %s23, 0
      %p108 = por %p106, %p107
      %s109 = ssub.s32 %s17, %s24
      %p110 = scmp.eq.s32.totalorder %s109, 0
      %s112 = sadd.s32 %s111, 1
      %s113 = scalar_select %p110, %s111, %s112
      %p116 = pneg %p110
      %p117 = scmp.eq.s32.totalorder %s17, 3
      %p118 = por %p116, %p117
      %p119 = scmp.ne.s32.totalorder %s111, %s114
      %p120 = scmp.eq.s32.totalorder %s17, 0
      %p121 = por %p119, %p120
      %p122 = scmp.ne.s32.totalorder %s111, %s114
      %p123 = scmp.eq.s32.totalorder %s22, 3
      %p124 = por %p122, %p123
      %p125 = scmp.ne.s32.totalorder %s114, %s115
      %p126 = scmp.eq.s32.totalorder %s22, 0
      %p127 = por %p125, %p126
      %p128 = scmp.ne.s32.totalorder %s114, %s115
      %p129 = scmp.eq.s32.totalorder %s23, 3
      %p130 = por %p128, %p129
      %p132 = scmp.ne.s32.totalorder %s115, %s131
      %p133 = scmp.eq.s32.totalorder %s23, 0
      %p134 = por %p132, %p133
      %s135 = ssub.s32 %s17, %s24
      %p136 = scmp.eq.s32.totalorder %s135, 0
      %s138 = sadd.s32 %s137, 1
      %s139 = scalar_select %p136, %s137, %s138
      %p142 = pneg %p136
      %p143 = scmp.eq.s32.totalorder %s17, 3
      %p144 = por %p142, %p143
      %p145 = scmp.ne.s32.totalorder %s137, %s140
      %p146 = scmp.eq.s32.totalorder %s17, 0
      %p147 = por %p145, %p146
      %p148 = scmp.ne.s32.totalorder %s137, %s140
      %p149 = scmp.eq.s32.totalorder %s22, 3
      %p150 = por %p148, %p149
      %p151 = scmp.ne.s32.totalorder %s140, %s141
      %p152 = scmp.eq.s32.totalorder %s22, 0
      %p153 = por %p151, %p152
      %p154 = scmp.ne.s32.totalorder %s140, %s141
      %p155 = scmp.eq.s32.totalorder %s23, 3
      %p156 = por %p154, %p155
      %p158 = scmp.ne.s32.totalorder %s141, %s157
      %p159 = scmp.eq.s32.totalorder %s23, 0
      %p160 = por %p158, %p159
      %p161 = scmp.le.s32.totalorder 1, %s17
      %p162 = scmp.lt.s32.totalorder %s17, 5
      %p163 = pnand %p161, %p162
      %p164 = pneg %p163
      // Predicated region
      $region9: #{tpu_custom_call.1} parent=5 // pred_check
        _
      $region10: #{tpu_custom_call.1} parent=5 // pred_check_branch
        %166 = sbr.rel (%p163) target = $region12
      $region11: #{tpu_custom_call.1} parent=5 // pred_region
        %s167 = ssub.s32 %s17, 1
        // Predicated region
        $region13: #{tpu_custom_call.1} parent=11 // pred_check
          %p168 = pneg %p38
        $region14: #{tpu_custom_call.1} parent=11 // pred_check_branch
          %170 = sbr.rel (%p168) target = $region16
        $region15: #{tpu_custom_call.1} parent=11 // pred_region
          %s172 = ssub.s32 6144, 6144
          %173 = vsyncadd [#allocation4], %s172
          %s174 = sshll.u32 [#allocation3], 4
          %s175 = int_to_ptr.vmem [resolvable:$true] %s174
          %180 = dma.hbm_to_vmem [thread:$0]  %s0, 6144, %s175, [#allocation4], 128, 128, 8
        $region16: #{tpu_custom_call.1} parent=11 // pred_fallthru
          _
        // Predicated region
        $region17: #{tpu_custom_call.1} parent=11 // pred_check
          %p181 = pneg %p59
        $region18: #{tpu_custom_call.1} parent=11 // pred_check_branch
          %183 = sbr.rel (%p181) target = $region20
        $region19: #{tpu_custom_call.1} parent=11 // pred_region
          %s185 = ssub.s32 2048, 2048
          %186 = vsyncadd [#allocation7], %s185
          %s187 = sshll.u32 [#allocation6], 4
          %s188 = int_to_ptr.vmem [resolvable:$true] %s187
          %193 = dma.hbm_to_vmem [thread:$0]  %s1, 2048, %s188, [#allocation7], 128, 128, 8
        $region20: #{tpu_custom_call.1} parent=11 // pred_fallthru
          _
        // Predicated region
        $region21: #{tpu_custom_call.1} parent=11 // pred_check
          %p194 = pneg %p80
        $region22: #{tpu_custom_call.1} parent=11 // pred_check_branch
          %196 = sbr.rel (%p194) target = $region24
        $region23: #{tpu_custom_call.1} parent=11 // pred_region
          %s198 = ssub.s32 6144, 6144
          %199 = vsyncadd [#allocation7], %s198
          %s200 = sshll.u32 [#allocation8], 4
          %s201 = int_to_ptr.vmem [resolvable:$true] %s200
          %206 = dma.hbm_to_vmem [thread:$0]  %s2, 6144, %s201, [#allocation7], 128, 128, 8
        $region24: #{tpu_custom_call.1} parent=11 // pred_fallthru
          _
        // Predicated region
        $region25: #{tpu_custom_call.1} parent=11 // pred_check
          %p207 = pneg %p101
        $region26: #{tpu_custom_call.1} parent=11 // pred_check_branch
          %209 = sbr.rel (%p207) target = $region28
        $region27: #{tpu_custom_call.1} parent=11 // pred_region
          %s211 = ssub.s32 2048, 2048
          %212 = vsyncadd [#allocation10], %s211
          %s213 = sshll.u32 [#allocation9], 4
          %s214 = int_to_ptr.vmem [resolvable:$true] %s213
          %219 = dma.hbm_to_vmem [thread:$0]  %s3, 2048, %s214, [#allocation10], 128, 128, 8
        $region28: #{tpu_custom_call.1} parent=11 // pred_fallthru
          _
      $region12: #{tpu_custom_call.1} parent=5 // pred_fallthru
        _
      %p220 = scmp.lt.s32.totalorder %s17, 4
      // Predicated region
      $region29: #{tpu_custom_call.1} parent=5 // pred_check
        %p221 = pneg %p220
      $region30: #{tpu_custom_call.1} parent=5 // pred_check_branch
        %223 = sbr.rel (%p221) target = $region32
      $region31: #{tpu_custom_call.1} parent=5 // pred_region
        // Predicated region
        $region33: #{tpu_custom_call.1} parent=31 // pred_check
          %p224 = pneg %p121
        $region34: #{tpu_custom_call.1} parent=31 // pred_check_branch
          %226 = sbr.rel (%p224) target = $region36
        $region35: #{tpu_custom_call.1} parent=31 // pred_region
          %s227 = sand.u32 %s17, 1
          %s228 = scalar_lea.sflag [#allocation4], %s227
          %s229 = sand.u32 %s111, 1
          %s230 = smul.addr %s229, 64
          %s231 = scalar_lea.vmem [#allocation11], %s230
          %s233 = ssub.s32 1024, 1024
          %234 = vsyncadd %s228, %s233
          %s235 = smul.addr %s17, 16
          %s236 = smul.addr %s235, 64
          %s237 = scalar_lea.hbm %s4, %s236
          %s238 = sshll.u32 %s231, 4
          %s239 = int_to_ptr.vmem [resolvable:$true] %s238
          %244 = dma.hbm_to_vmem [thread:$0]  %s237, 1024, %s239, %s228, 64, 64, 4
        $region36: #{tpu_custom_call.1} parent=31 // pred_fallthru
          _
      $region32: #{tpu_custom_call.1} parent=5 // pred_fallthru
        _
      %p245 = scmp.le.s32.totalorder 1, %s17
      %p246 = scmp.lt.s32.totalorder %s17, 5
      %p247 = pnand %p245, %p246
      %p248 = pneg %p247
      // Predicated region
      $region37: #{tpu_custom_call.1} parent=5 // pred_check
        _
      $region38: #{tpu_custom_call.1} parent=5 // pred_check_branch
        %250 = sbr.rel (%p247) target = $region40
      $region39: #{tpu_custom_call.1} parent=5 // pred_region
        %s251 = ssub.s32 %s17, 1
        // Predicated region
        $region41: #{tpu_custom_call.1} parent=39 // pred_check
          %p252 = pneg %p38
        $region42: #{tpu_custom_call.1} parent=39 // pred_check_branch
          %254 = sbr.rel (%p252) target = $region44
        $region43: #{tpu_custom_call.1} parent=39 // pred_region
          %255 = dma.done [#allocation4], 6144
        $region44: #{tpu_custom_call.1} parent=39 // pred_fallthru
          _
        // Predicated region
        $region45: #{tpu_custom_call.1} parent=39 // pred_check
          %p256 = pneg %p59
        $region46: #{tpu_custom_call.1} parent=39 // pred_check_branch
          %258 = sbr.rel (%p256) target = $region48
        $region47: #{tpu_custom_call.1} parent=39 // pred_region
          %259 = dma.done [#allocation7], 2048
        $region48: #{tpu_custom_call.1} parent=39 // pred_fallthru
          _
        // Predicated region
        $region49: #{tpu_custom_call.1} parent=39 // pred_check
          %p260 = pneg %p80
        $region50: #{tpu_custom_call.1} parent=39 // pred_check_branch
          %262 = sbr.rel (%p260) target = $region52
        $region51: #{tpu_custom_call.1} parent=39 // pred_region
          %263 = dma.done [#allocation7], 6144
        $region52: #{tpu_custom_call.1} parent=39 // pred_fallthru
          _
        // Predicated region
        $region53: #{tpu_custom_call.1} parent=39 // pred_check
          %p264 = pneg %p101
        $region54: #{tpu_custom_call.1} parent=39 // pred_check_branch
          %266 = sbr.rel (%p264) target = $region56
        $region55: #{tpu_custom_call.1} parent=39 // pred_region
          %267 = dma.done [#allocation10], 2048
        $region56: #{tpu_custom_call.1} parent=39 // pred_fallthru
          _
        %s268 = sand.u32 %s22, 1
        %s269 = scalar_lea.sflag [#allocation4], %s268
        %s270 = sand.u32 %s114, 1
        %s271 = smul.addr %s270, 64
        %s272 = scalar_lea.vmem [#allocation11], %s271
        // Predicated region
        $region57: #{tpu_custom_call.1} parent=39 // pred_check
          %p273 = pneg %p127
        $region58: #{tpu_custom_call.1} parent=39 // pred_check_branch
          %275 = sbr.rel (%p273) target = $region60
        $region59: #{tpu_custom_call.1} parent=39 // pred_region
          %276 = dma.done %s269, 1024
        $region60: #{tpu_custom_call.1} parent=39 // pred_fallthru
          _
        %p277 = pneg %p38
        %p278 = pneg %p35
        %p279 = pneg %p59
        %p280 = pneg %p56
        %p281 = pneg %p80
        %p282 = pneg %p77
        %p283 = pneg %p101
        %p284 = pneg %p98
        %s285 = sand.u32 %s22, 1
        %s286 = scalar_lea.sflag [#allocation4], %s285
        %s287 = sand.u32 %s114, 1
        %s288 = smul.addr %s287, 64
        %s289 = scalar_lea.vmem [#allocation11], %s288
        %p290 = pneg %p127
        %p291 = pneg %p124
        %p292 = pneg %p153
        %p293 = pneg %p150
        %s294 = sand.u32 %s140, 1
        %s295 = scalar_lea.sflag [#allocation5], %s294
        %s296 = sand.u32 %s140, 1
        %s297 = smul.addr %s296, 64
        %s298 = scalar_lea.vmem [#allocation12], %s297
        %p300 = scmp.eq.s32.totalorder %s22, 0
        // Predicated region
        $region61: #{tpu_custom_call.1} parent=39 // pred_check
          %p301 = pneg %p300
        $region62: #{tpu_custom_call.1} parent=39 // pred_check_branch
          %303 = sbr.rel (%p301) target = $region64
        $region63: #{tpu_custom_call.1} parent=39 // pred_region
          %v304 = vld [vmem:[#allocation9] sm:$0xff]
          %v305 = vld [vmem:[#allocation9 + $0x8] sm:$0xff]
          %v306 = vld [vmem:[#allocation9 + $0x10] sm:$0xff]
          %v307 = vld [vmem:[#allocation9 + $0x18] sm:$0xff]
          %v308 = vld [vmem:[#allocation9 + $0x20] sm:$0xff]
          %v309 = vld [vmem:[#allocation9 + $0x28] sm:$0xff]
          %v310 = vld [vmem:[#allocation9 + $0x30] sm:$0xff]
          %v311 = vld [vmem:[#allocation9 + $0x38] sm:$0xff]
          %v312 = vld [vmem:[#allocation9 + $0x40] sm:$0xff]
          %v313 = vld [vmem:[#allocation9 + $0x48] sm:$0xff]
          %v314 = vld [vmem:[#allocation9 + $0x50] sm:$0xff]
          %v315 = vld [vmem:[#allocation9 + $0x58] sm:$0xff]
          %v316 = vld [vmem:[#allocation9 + $0x60] sm:$0xff]
          %v317 = vld [vmem:[#allocation9 + $0x68] sm:$0xff]
          %v318 = vld [vmem:[#allocation9 + $0x70] sm:$0xff]
          %v319 = vld [vmem:[#allocation9 + $0x78] sm:$0xff]
          %320 = vst [vmem:[#allocation2] sm:$0xff] %v304
          %321 = vst [vmem:[#allocation2 + $0x8] sm:$0xff] %v305
          %322 = vst [vmem:[#allocation2 + $0x10] sm:$0xff] %v306
          %323 = vst [vmem:[#allocation2 + $0x18] sm:$0xff] %v307
          %324 = vst [vmem:[#allocation2 + $0x20] sm:$0xff] %v308
          %325 = vst [vmem:[#allocation2 + $0x28] sm:$0xff] %v309
          %326 = vst [vmem:[#allocation2 + $0x30] sm:$0xff] %v310
          %327 = vst [vmem:[#allocation2 + $0x38] sm:$0xff] %v311
          %328 = vst [vmem:[#allocation2 + $0x40] sm:$0xff] %v312
          %329 = vst [vmem:[#allocation2 + $0x48] sm:$0xff] %v313
          %330 = vst [vmem:[#allocation2 + $0x50] sm:$0xff] %v314
          %331 = vst [vmem:[#allocation2 + $0x58] sm:$0xff] %v315
          %332 = vst [vmem:[#allocation2 + $0x60] sm:$0xff] %v316
          %333 = vst [vmem:[#allocation2 + $0x68] sm:$0xff] %v317
          %334 = vst [vmem:[#allocation2 + $0x70] sm:$0xff] %v318
          %335 = vst [vmem:[#allocation2 + $0x78] sm:$0xff] %v319
        $region64: #{tpu_custom_call.1} parent=39 // pred_fallthru
          _
        %v336 = vld [vmem:[#allocation2] sm:$0xff]
        %v337 = vld [vmem:[#allocation2 + $0x8] sm:$0xff]
        %v338 = vld [vmem:[#allocation2 + $0x10] sm:$0xff]
        %v339 = vld [vmem:[#allocation2 + $0x18] sm:$0xff]
        %v340 = vld [vmem:[#allocation2 + $0x20] sm:$0xff]
        %v341 = vld [vmem:[#allocation2 + $0x28] sm:$0xff]
        %v342 = vld [vmem:[#allocation2 + $0x30] sm:$0xff]
        %v343 = vld [vmem:[#allocation2 + $0x38] sm:$0xff]
        %v344 = vld [vmem:[#allocation2 + $0x40] sm:$0xff]
        %v345 = vld [vmem:[#allocation2 + $0x48] sm:$0xff]
        %v346 = vld [vmem:[#allocation2 + $0x50] sm:$0xff]
        %v347 = vld [vmem:[#allocation2 + $0x58] sm:$0xff]
        %v348 = vld [vmem:[#allocation2 + $0x60] sm:$0xff]
        %v349 = vld [vmem:[#allocation2 + $0x68] sm:$0xff]
        %v350 = vld [vmem:[#allocation2 + $0x70] sm:$0xff]
        %v351 = vld [vmem:[#allocation2 + $0x78] sm:$0xff]
        %v352 = vld [vmem:[#allocation3] sm:$0xff]
        %v353 = vld [vmem:[#allocation3 + $0x8] sm:$0xff]
        %v354 = vld [vmem:[#allocation3 + $0x10] sm:$0xff]
        %v355 = vld [vmem:[#allocation3 + $0x18] sm:$0xff]
        %v356 = vld [vmem:[#allocation3 + $0x20] sm:$0xff]
        %v357 = vld [vmem:[#allocation3 + $0x28] sm:$0xff]
        %v358 = vld [vmem:[#allocation3 + $0x30] sm:$0xff]
        %v359 = vld [vmem:[#allocation3 + $0x38] sm:$0xff]
        %v360 = vld [vmem:[#allocation3 + $0x40] sm:$0xff]
        %v361 = vld [vmem:[#allocation3 + $0x48] sm:$0xff]
        %v362 = vld [vmem:[#allocation3 + $0x50] sm:$0xff]
        %v363 = vld [vmem:[#allocation3 + $0x58] sm:$0xff]
        %v364 = vld [vmem:[#allocation3 + $0x60] sm:$0xff]
        %v365 = vld [vmem:[#allocation3 + $0x68] sm:$0xff]
        %v366 = vld [vmem:[#allocation3 + $0x70] sm:$0xff]
        %v367 = vld [vmem:[#allocation3 + $0x78] sm:$0xff]
        %v368 = vld [vmem:[#allocation3 + $0x80] sm:$0xff]
        %v369 = vld [vmem:[#allocation3 + $0x88] sm:$0xff]
        %v370 = vld [vmem:[#allocation3 + $0x90] sm:$0xff]
        %v371 = vld [vmem:[#allocation3 + $0x98] sm:$0xff]
        %v372 = vld [vmem:[#allocation3 + $0xa0] sm:$0xff]
        %v373 = vld [vmem:[#allocation3 + $0xa8] sm:$0xff]
        %v374 = vld [vmem:[#allocation3 + $0xb0] sm:$0xff]
        %v375 = vld [vmem:[#allocation3 + $0xb8] sm:$0xff]
        %v376 = vld [vmem:[#allocation3 + $0xc0] sm:$0xff]
        %v377 = vld [vmem:[#allocation3 + $0xc8] sm:$0xff]
        %v378 = vld [vmem:[#allocation3 + $0xd0] sm:$0xff]
        %v379 = vld [vmem:[#allocation3 + $0xd8] sm:$0xff]
        %v380 = vld [vmem:[#allocation3 + $0xe0] sm:$0xff]
        %v381 = vld [vmem:[#allocation3 + $0xe8] sm:$0xff]
        %v382 = vld [vmem:[#allocation3 + $0xf0] sm:$0xff]
        %v383 = vld [vmem:[#allocation3 + $0xf8] sm:$0xff]
        %v384 = vld [vmem:[#allocation3 + $0x100] sm:$0xff]
        %v385 = vld [vmem:[#allocation3 + $0x108] sm:$0xff]
        %v386 = vld [vmem:[#allocation3 + $0x110] sm:$0xff]
        %v387 = vld [vmem:[#allocation3 + $0x118] sm:$0xff]
        %v388 = vld [vmem:[#allocation3 + $0x120] sm:$0xff]
        %v389 = vld [vmem:[#allocation3 + $0x128] sm:$0xff]
        %v390 = vld [vmem:[#allocation3 + $0x130] sm:$0xff]
        %v391 = vld [vmem:[#allocation3 + $0x138] sm:$0xff]
        %v392 = vld [vmem:[#allocation3 + $0x140] sm:$0xff]
        %v393 = vld [vmem:[#allocation3 + $0x148] sm:$0xff]
        %v394 = vld [vmem:[#allocation3 + $0x150] sm:$0xff]
        %v395 = vld [vmem:[#allocation3 + $0x158] sm:$0xff]
        %v396 = vld [vmem:[#allocation3 + $0x160] sm:$0xff]
        %v397 = vld [vmem:[#allocation3 + $0x168] sm:$0xff]
        %v398 = vld [vmem:[#allocation3 + $0x170] sm:$0xff]
        %v399 = vld [vmem:[#allocation3 + $0x178] sm:$0xff]
        %v400 = vld [vmem:[#allocation8] sm:$0xff]
        %v401 = vld [vmem:[#allocation8 + $0x8] sm:$0xff]
        %v402 = vld [vmem:[#allocation8 + $0x10] sm:$0xff]
        %v403 = vld [vmem:[#allocation8 + $0x18] sm:$0xff]
        %v404 = vld [vmem:[#allocation8 + $0x20] sm:$0xff]
        %v405 = vld [vmem:[#allocation8 + $0x28] sm:$0xff]
        %v406 = vld [vmem:[#allocation8 + $0x30] sm:$0xff]
        %v407 = vld [vmem:[#allocation8 + $0x38] sm:$0xff]
        %v408 = vld [vmem:[#allocation8 + $0x40] sm:$0xff]
        %v409 = vld [vmem:[#allocation8 + $0x48] sm:$0xff]
        %v410 = vld [vmem:[#allocation8 + $0x50] sm:$0xff]
        %v411 = vld [vmem:[#allocation8 + $0x58] sm:$0xff]
        %v412 = vld [vmem:[#allocation8 + $0x60] sm:$0xff]
        %v413 = vld [vmem:[#allocation8 + $0x68] sm:$0xff]
        %v414 = vld [vmem:[#allocation8 + $0x70] sm:$0xff]
        %v415 = vld [vmem:[#allocation8 + $0x78] sm:$0xff]
        %v416 = vld [vmem:[#allocation8 + $0x80] sm:$0xff]
        %v417 = vld [vmem:[#allocation8 + $0x88] sm:$0xff]
        %v418 = vld [vmem:[#allocation8 + $0x90] sm:$0xff]
        %v419 = vld [vmem:[#allocation8 + $0x98] sm:$0xff]
        %v420 = vld [vmem:[#allocation8 + $0xa0] sm:$0xff]
        %v421 = vld [vmem:[#allocation8 + $0xa8] sm:$0xff]
        %v422 = vld [vmem:[#allocation8 + $0xb0] sm:$0xff]
        %v423 = vld [vmem:[#allocation8 + $0xb8] sm:$0xff]
        %v424 = vld [vmem:[#allocation8 + $0xc0] sm:$0xff]
        %v425 = vld [vmem:[#allocation8 + $0xc8] sm:$0xff]
        %v426 = vld [vmem:[#allocation8 + $0xd0] sm:$0xff]
        %v427 = vld [vmem:[#allocation8 + $0xd8] sm:$0xff]
        %v428 = vld [vmem:[#allocation8 + $0xe0] sm:$0xff]
        %v429 = vld [vmem:[#allocation8 + $0xe8] sm:$0xff]
        %v430 = vld [vmem:[#allocation8 + $0xf0] sm:$0xff]
        %v431 = vld [vmem:[#allocation8 + $0xf8] sm:$0xff]
        %v432 = vld [vmem:[#allocation8 + $0x100] sm:$0xff]
        %v433 = vld [vmem:[#allocation8 + $0x108] sm:$0xff]
        %v434 = vld [vmem:[#allocation8 + $0x110] sm:$0xff]
        %v435 = vld [vmem:[#allocation8 + $0x118] sm:$0xff]
        %v436 = vld [vmem:[#allocation8 + $0x120] sm:$0xff]
        %v437 = vld [vmem:[#allocation8 + $0x128] sm:$0xff]
        %v438 = vld [vmem:[#allocation8 + $0x130] sm:$0xff]
        %v439 = vld [vmem:[#allocation8 + $0x138] sm:$0xff]
        %v440 = vld [vmem:[#allocation8 + $0x140] sm:$0xff]
        %v441 = vld [vmem:[#allocation8 + $0x148] sm:$0xff]
        %v442 = vld [vmem:[#allocation8 + $0x150] sm:$0xff]
        %v443 = vld [vmem:[#allocation8 + $0x158] sm:$0xff]
        %v444 = vld [vmem:[#allocation8 + $0x160] sm:$0xff]
        %v445 = vld [vmem:[#allocation8 + $0x168] sm:$0xff]
        %v446 = vld [vmem:[#allocation8 + $0x170] sm:$0xff]
        %v447 = vld [vmem:[#allocation8 + $0x178] sm:$0xff]
        %448 = vmatprep.subr.mxu0 0.0
        %449 = vmatpush1.msra.mxu0 %v351
        %450 = vmatprep.subr.mxu0 0.0
        %451 = vmatpush1.msra.mxu0 %v350
        %452 = vmatprep.subr.mxu0 0.0
        %453 = vmatpush1.msra.mxu0 %v349
        %454 = vmatprep.subr.mxu0 0.0
        %455 = vmatpush1.msra.mxu0 %v348
        %456 = vmatprep.subr.mxu0 0.0
        %457 = vmatpush1.msra.mxu0 %v347
        %458 = vmatprep.subr.mxu0 0.0
        %459 = vmatpush1.msra.mxu0 %v346
        %460 = vmatprep.subr.mxu0 0.0
        %461 = vmatpush1.msra.mxu0 %v345
        %462 = vmatprep.subr.mxu0 0.0
        %463 = vmatpush1.msra.mxu0 %v344
        %464 = vmatprep.subr.mxu0 0.0
        %465 = vmatpush1.msra.mxu0 %v343
        %466 = vmatprep.subr.mxu0 0.0
        %467 = vmatpush1.msra.mxu0 %v342
        %468 = vmatprep.subr.mxu0 0.0
        %469 = vmatpush1.msra.mxu0 %v341
        %470 = vmatprep.subr.mxu0 0.0
        %471 = vmatpush1.msra.mxu0 %v340
        %472 = vmatprep.subr.mxu0 0.0
        %473 = vmatpush1.msra.mxu0 %v339
        %474 = vmatprep.subr.mxu0 0.0
        %475 = vmatpush1.msra.mxu0 %v338
        %476 = vmatprep.subr.mxu0 0.0
        %477 = vmatpush1.msra.mxu0 %v337
        %478 = vmatprep.subr.mxu0 0.0
        %479 = vmatpush1.msra.mxu0 %v336
        %480 = vmatprep.subr.mxu0 0.0
        %481 = vmatpush2.msra.mxu0 0.0
        %482 = vmatprep.subr.mxu0 0.0
        %483 = vmatpush2.msra.mxu0 0.0
        %484 = vmatprep.subr.mxu0 0.0
        %485 = vmatpush2.msra.mxu0 0.0
        %486 = vmatprep.subr.mxu0 0.0
        %487 = vmatpush2.msra.mxu0 0.0
        %488 = vmatprep.subr.mxu0 0.0
        %489 = vmatpush2.msra.mxu0 0.0
        %490 = vmatprep.subr.mxu0 0.0
        %491 = vmatpush2.msra.mxu0 0.0
        %492 = vmatprep.subr.mxu0 0.0
        %493 = vmatpush2.msra.mxu0 0.0
        %494 = vmatprep.subr.mxu0 0.0
        %495 = vmatpush2.msra.mxu0 0.0
        %496 = vmatprep.subr.mxu0 0.0
        %497 = vmatpush2.msra.mxu0 0.0
        %498 = vmatprep.subr.mxu0 0.0
        %499 = vmatpush2.msra.mxu0 0.0
        %500 = vmatprep.subr.mxu0 0.0
        %501 = vmatpush2.msra.mxu0 0.0
        %502 = vmatprep.subr.mxu0 0.0
        %503 = vmatpush2.msra.mxu0 0.0
        %504 = vmatprep.subr.mxu0 0.0
        %505 = vmatpush2.msra.mxu0 0.0
        %506 = vmatprep.subr.mxu0 0.0
        %507 = vmatpush2.msra.mxu0 0.0
        %508 = vmatprep.subr.mxu0 0.0
        %509 = vmatpush2.msra.mxu0 0.0
        %510 = vmatprep.subr.mxu0 0.0
        %511 = vmatpush2.msra.mxu0 0.0
        %512 = vmatprep.mubr.f32.mxu0 0.0
        %513 = vmatmul.mubr.f32.gmra.mxu0 %v352
        %v514 = vpop.f32.mrf.mxu0
        %v515 = vadd.f32 %v400, %v514
        %v516 = vpop.f32.mrf.mxu0
        %517 = vmatprep.mubr.f32.mxu0 0.0
        %518 = vmatmul.mubr.f32.gmra.mxu0 %v353
        %v519 = vpop.f32.mrf.mxu0
        %v520 = vadd.f32 %v401, %v519
        %v521 = vpop.f32.mrf.mxu0
        %522 = vmatprep.mubr.f32.mxu0 0.0
        %523 = vmatmul.mubr.f32.gmra.mxu0 %v354
        %v524 = vpop.f32.mrf.mxu0
        %v525 = vadd.f32 %v402, %v524
        %v526 = vpop.f32.mrf.mxu0
        %527 = vmatprep.mubr.f32.mxu0 0.0
        %528 = vmatmul.mubr.f32.gmra.mxu0 %v355
        %v529 = vpop.f32.mrf.mxu0
        %v530 = vadd.f32 %v403, %v529
        %v531 = vpop.f32.mrf.mxu0
        %532 = vmatprep.mubr.f32.mxu0 0.0
        %533 = vmatmul.mubr.f32.gmra.mxu0 %v356
        %v534 = vpop.f32.mrf.mxu0
        %v535 = vadd.f32 %v404, %v534
        %v536 = vpop.f32.mrf.mxu0
        %537 = vmatprep.mubr.f32.mxu0 0.0
        %538 = vmatmul.mubr.f32.gmra.mxu0 %v357
        %v539 = vpop.f32.mrf.mxu0
        %v540 = vadd.f32 %v405, %v539
        %v541 = vpop.f32.mrf.mxu0
        %542 = vmatprep.mubr.f32.mxu0 0.0
        %543 = vmatmul.mubr.f32.gmra.mxu0 %v358
        %v544 = vpop.f32.mrf.mxu0
        %v545 = vadd.f32 %v406, %v544
        %v546 = vpop.f32.mrf.mxu0
        %547 = vmatprep.mubr.f32.mxu0 0.0
        %548 = vmatmul.mubr.f32.gmra.mxu0 %v359
        %v549 = vpop.f32.mrf.mxu0
        %v550 = vadd.f32 %v407, %v549
        %v551 = vpop.f32.mrf.mxu0
        %552 = vmatprep.mubr.f32.mxu0 0.0
        %553 = vmatmul.mubr.f32.gmra.mxu0 %v360
        %v554 = vpop.f32.mrf.mxu0
        %v555 = vadd.f32 %v408, %v554
        %v556 = vpop.f32.mrf.mxu0
        %557 = vmatprep.mubr.f32.mxu0 0.0
        %558 = vmatmul.mubr.f32.gmra.mxu0 %v361
        %v559 = vpop.f32.mrf.mxu0
        %v560 = vadd.f32 %v409, %v559
        %v561 = vpop.f32.mrf.mxu0
        %562 = vmatprep.mubr.f32.mxu0 0.0
        %563 = vmatmul.mubr.f32.gmra.mxu0 %v362
        %v564 = vpop.f32.mrf.mxu0
        %v565 = vadd.f32 %v410, %v564
        %v566 = vpop.f32.mrf.mxu0
        %567 = vmatprep.mubr.f32.mxu0 0.0
        %568 = vmatmul.mubr.f32.gmra.mxu0 %v363
        %v569 = vpop.f32.mrf.mxu0
        %v570 = vadd.f32 %v411, %v569
        %v571 = vpop.f32.mrf.mxu0
        %572 = vmatprep.mubr.f32.mxu0 0.0
        %573 = vmatmul.mubr.f32.gmra.mxu0 %v364
        %v574 = vpop.f32.mrf.mxu0
        %v575 = vadd.f32 %v412, %v574
        %v576 = vpop.f32.mrf.mxu0
        %577 = vmatprep.mubr.f32.mxu0 0.0
        %578 = vmatmul.mubr.f32.gmra.mxu0 %v365
        %v579 = vpop.f32.mrf.mxu0
        %v580 = vadd.f32 %v413, %v579
        %v581 = vpop.f32.mrf.mxu0
        %582 = vmatprep.mubr.f32.mxu0 0.0
        %583 = vmatmul.mubr.f32.gmra.mxu0 %v366
        %v584 = vpop.f32.mrf.mxu0
        %v585 = vadd.f32 %v414, %v584
        %v586 = vpop.f32.mrf.mxu0
        %587 = vmatprep.mubr.f32.mxu0 0.0
        %588 = vmatmul.mubr.f32.gmra.mxu0 %v367
        %v589 = vpop.f32.mrf.mxu0
        %v590 = vadd.f32 %v415, %v589
        %v591 = vpop.f32.mrf.mxu0
        %592 = vmatprep.mubr.f32.mxu0 0.0
        %593 = vmatmul.mubr.f32.gmra.mxu0 %v368
        %v594 = vpop.f32.mrf.mxu0
        %v595 = vadd.f32 %v416, %v594
        %v596 = vpop.f32.mrf.mxu0
        %597 = vmatprep.mubr.f32.mxu0 0.0
        %598 = vmatmul.mubr.f32.gmra.mxu0 %v369
        %v599 = vpop.f32.mrf.mxu0
        %v600 = vadd.f32 %v417, %v599
        %v601 = vpop.f32.mrf.mxu0
        %602 = vmatprep.mubr.f32.mxu0 0.0
        %603 = vmatmul.mubr.f32.gmra.mxu0 %v370
        %v604 = vpop.f32.mrf.mxu0
        %v605 = vadd.f32 %v418, %v604
        %v606 = vpop.f32.mrf.mxu0
        %607 = vmatprep.mubr.f32.mxu0 0.0
        %608 = vmatmul.mubr.f32.gmra.mxu0 %v371
        %v609 = vpop.f32.mrf.mxu0
        %v610 = vadd.f32 %v419, %v609
        %v611 = vpop.f32.mrf.mxu0
        %612 = vmatprep.mubr.f32.mxu0 0.0
        %613 = vmatmul.mubr.f32.gmra.mxu0 %v372
        %v614 = vpop.f32.mrf.mxu0
        %v615 = vadd.f32 %v420, %v614
        %v616 = vpop.f32.mrf.mxu0
        %617 = vmatprep.mubr.f32.mxu0 0.0
        %618 = vmatmul.mubr.f32.gmra.mxu0 %v373
        %v619 = vpop.f32.mrf.mxu0
        %v620 = vadd.f32 %v421, %v619
        %v621 = vpop.f32.mrf.mxu0
        %622 = vmatprep.mubr.f32.mxu0 0.0
        %623 = vmatmul.mubr.f32.gmra.mxu0 %v374
        %v624 = vpop.f32.mrf.mxu0
        %v625 = vadd.f32 %v422, %v624
        %v626 = vpop.f32.mrf.mxu0
        %627 = vmatprep.mubr.f32.mxu0 0.0
        %628 = vmatmul.mubr.f32.gmra.mxu0 %v375
        %v629 = vpop.f32.mrf.mxu0
        %v630 = vadd.f32 %v423, %v629
        %v631 = vpop.f32.mrf.mxu0
        %632 = vmatprep.mubr.f32.mxu0 0.0
        %633 = vmatmul.mubr.f32.gmra.mxu0 %v376
        %v634 = vpop.f32.mrf.mxu0
        %v635 = vadd.f32 %v424, %v634
        %v636 = vpop.f32.mrf.mxu0
        %637 = vmatprep.mubr.f32.mxu0 0.0
        %638 = vmatmul.mubr.f32.gmra.mxu0 %v377
        %v639 = vpop.f32.mrf.mxu0
        %v640 = vadd.f32 %v425, %v639
        %v641 = vpop.f32.mrf.mxu0
        %642 = vmatprep.mubr.f32.mxu0 0.0
        %643 = vmatmul.mubr.f32.gmra.mxu0 %v378
        %v644 = vpop.f32.mrf.mxu0
        %v645 = vadd.f32 %v426, %v644
        %v646 = vpop.f32.mrf.mxu0
        %647 = vmatprep.mubr.f32.mxu0 0.0
        %648 = vmatmul.mubr.f32.gmra.mxu0 %v379
        %v649 = vpop.f32.mrf.mxu0
        %v650 = vadd.f32 %v427, %v649
        %v651 = vpop.f32.mrf.mxu0
        %652 = vmatprep.mubr.f32.mxu0 0.0
        %653 = vmatmul.mubr.f32.gmra.mxu0 %v380
        %v654 = vpop.f32.mrf.mxu0
        %v655 = vadd.f32 %v428, %v654
        %v656 = vpop.f32.mrf.mxu0
        %657 = vmatprep.mubr.f32.mxu0 0.0
        %658 = vmatmul.mubr.f32.gmra.mxu0 %v381
        %v659 = vpop.f32.mrf.mxu0
        %v660 = vadd.f32 %v429, %v659
        %v661 = vpop.f32.mrf.mxu0
        %662 = vmatprep.mubr.f32.mxu0 0.0
        %663 = vmatmul.mubr.f32.gmra.mxu0 %v382
        %v664 = vpop.f32.mrf.mxu0
        %v665 = vadd.f32 %v430, %v664
        %v666 = vpop.f32.mrf.mxu0
        %667 = vmatprep.mubr.f32.mxu0 0.0
        %668 = vmatmul.mubr.f32.gmra.mxu0 %v383
        %v669 = vpop.f32.mrf.mxu0
        %v670 = vadd.f32 %v431, %v669
        %v671 = vpop.f32.mrf.mxu0
        %672 = vmatprep.mubr.f32.mxu0 0.0
        %673 = vmatmul.mubr.f32.gmra.mxu0 %v384
        %v674 = vpop.f32.mrf.mxu0
        %v675 = vadd.f32 %v432, %v674
        %v676 = vpop.f32.mrf.mxu0
        %677 = vmatprep.mubr.f32.mxu0 0.0
        %678 = vmatmul.mubr.f32.gmra.mxu0 %v385
        %v679 = vpop.f32.mrf.mxu0
        %v680 = vadd.f32 %v433, %v679
        %v681 = vpop.f32.mrf.mxu0
        %682 = vmatprep.mubr.f32.mxu0 0.0
        %683 = vmatmul.mubr.f32.gmra.mxu0 %v386
        %v684 = vpop.f32.mrf.mxu0
        %v685 = vadd.f32 %v434, %v684
        %v686 = vpop.f32.mrf.mxu0
        %687 = vmatprep.mubr.f32.mxu0 0.0
        %688 = vmatmul.mubr.f32.gmra.mxu0 %v387
        %v689 = vpop.f32.mrf.mxu0
        %v690 = vadd.f32 %v435, %v689
        %v691 = vpop.f32.mrf.mxu0
        %692 = vmatprep.mubr.f32.mxu0 0.0
        %693 = vmatmul.mubr.f32.gmra.mxu0 %v388
        %v694 = vpop.f32.mrf.mxu0
        %v695 = vadd.f32 %v436, %v694
        %v696 = vpop.f32.mrf.mxu0
        %697 = vmatprep.mubr.f32.mxu0 0.0
        %698 = vmatmul.mubr.f32.gmra.mxu0 %v389
        %v699 = vpop.f32.mrf.mxu0
        %v700 = vadd.f32 %v437, %v699
        %v701 = vpop.f32.mrf.mxu0
        %702 = vmatprep.mubr.f32.mxu0 0.0
        %703 = vmatmul.mubr.f32.gmra.mxu0 %v390
        %v704 = vpop.f32.mrf.mxu0
        %v705 = vadd.f32 %v438, %v704
        %v706 = vpop.f32.mrf.mxu0
        %707 = vmatprep.mubr.f32.mxu0 0.0
        %708 = vmatmul.mubr.f32.gmra.mxu0 %v391
        %v709 = vpop.f32.mrf.mxu0
        %v710 = vadd.f32 %v439, %v709
        %v711 = vpop.f32.mrf.mxu0
        %712 = vmatprep.mubr.f32.mxu0 0.0
        %713 = vmatmul.mubr.f32.gmra.mxu0 %v392
        %v714 = vpop.f32.mrf.mxu0
        %v715 = vadd.f32 %v440, %v714
        %v716 = vpop.f32.mrf.mxu0
        %717 = vmatprep.mubr.f32.mxu0 0.0
        %718 = vmatmul.mubr.f32.gmra.mxu0 %v393
        %v719 = vpop.f32.mrf.mxu0
        %v720 = vadd.f32 %v441, %v719
        %v721 = vpop.f32.mrf.mxu0
        %722 = vmatprep.mubr.f32.mxu0 0.0
        %723 = vmatmul.mubr.f32.gmra.mxu0 %v394
        %v724 = vpop.f32.mrf.mxu0
        %v725 = vadd.f32 %v442, %v724
        %v726 = vpop.f32.mrf.mxu0
        %727 = vmatprep.mubr.f32.mxu0 0.0
        %728 = vmatmul.mubr.f32.gmra.mxu0 %v395
        %v729 = vpop.f32.mrf.mxu0
        %v730 = vadd.f32 %v443, %v729
        %v731 = vpop.f32.mrf.mxu0
        %732 = vmatprep.mubr.f32.mxu0 0.0
        %733 = vmatmul.mubr.f32.gmra.mxu0 %v396
        %v734 = vpop.f32.mrf.mxu0
        %v735 = vadd.f32 %v444, %v734
        %v736 = vpop.f32.mrf.mxu0
        %737 = vmatprep.mubr.f32.mxu0 0.0
        %738 = vmatmul.mubr.f32.gmra.mxu0 %v397
        %v739 = vpop.f32.mrf.mxu0
        %v740 = vadd.f32 %v445, %v739
        %v741 = vpop.f32.mrf.mxu0
        %742 = vmatprep.mubr.f32.mxu0 0.0
        %743 = vmatmul.mubr.f32.gmra.mxu0 %v398
        %v744 = vpop.f32.mrf.mxu0
        %v745 = vadd.f32 %v446, %v744
        %v746 = vpop.f32.mrf.mxu0
        %747 = vmatprep.mubr.f32.mxu0 0.0
        %748 = vmatmul.mubr.f32.gmra.mxu0 %v399
        %v749 = vpop.f32.mrf.mxu0
        %v750 = vadd.f32 %v447, %v749
        %v751 = vpop.f32.mrf.mxu0
        %752 = vdwg.mxu0
        %v753 = vxor.u32 %v515, 2147483648
        %v754 = vxor.u32 %v520, 2147483648
        %v755 = vxor.u32 %v525, 2147483648
        %v756 = vxor.u32 %v530, 2147483648
        %v757 = vxor.u32 %v535, 2147483648
        %v758 = vxor.u32 %v540, 2147483648
        %v759 = vxor.u32 %v545, 2147483648
        %v760 = vxor.u32 %v550, 2147483648
        %v761 = vxor.u32 %v555, 2147483648
        %v762 = vxor.u32 %v560, 2147483648
        %v763 = vxor.u32 %v565, 2147483648
        %v764 = vxor.u32 %v570, 2147483648
        %v765 = vxor.u32 %v575, 2147483648
        %v766 = vxor.u32 %v580, 2147483648
        %v767 = vxor.u32 %v585, 2147483648
        %v768 = vxor.u32 %v590, 2147483648
        %v769 = vmul.f32 %v753, 1.442695
        %v770 = vpow.pop %v769
        %v771 = vmul.f32 %v754, 1.442695
        %v772 = vpow.pop %v771
        %v773 = vmul.f32 %v755, 1.442695
        %v774 = vpow.pop %v773
        %v775 = vmul.f32 %v756, 1.442695
        %v776 = vpow.pop %v775
        %v777 = vmul.f32 %v757, 1.442695
        %v778 = vpow.pop %v777
        %v779 = vmul.f32 %v758, 1.442695
        %v780 = vpow.pop %v779
        %v781 = vmul.f32 %v759, 1.442695
        %v782 = vpow.pop %v781
        %v783 = vmul.f32 %v760, 1.442695
        %v784 = vpow.pop %v783
        %v785 = vmul.f32 %v761, 1.442695
        %v786 = vpow.pop %v785
        %v787 = vmul.f32 %v762, 1.442695
        %v788 = vpow.pop %v787
        %v789 = vmul.f32 %v763, 1.442695
        %v790 = vpow.pop %v789
        %v791 = vmul.f32 %v764, 1.442695
        %v792 = vpow.pop %v791
        %v793 = vmul.f32 %v765, 1.442695
        %v794 = vpow.pop %v793
        %v795 = vmul.f32 %v766, 1.442695
        %v796 = vpow.pop %v795
        %v797 = vmul.f32 %v767, 1.442695
        %v798 = vpow.pop %v797
        %v799 = vmul.f32 %v768, 1.442695
        %v800 = vpow.pop %v799
        %v801 = vadd.f32 %v770, 1.0
        %v802 = vadd.f32 %v772, 1.0
        %v803 = vadd.f32 %v774, 1.0
        %v804 = vadd.f32 %v776, 1.0
        %v805 = vadd.f32 %v778, 1.0
        %v806 = vadd.f32 %v780, 1.0
        %v807 = vadd.f32 %v782, 1.0
        %v808 = vadd.f32 %v784, 1.0
        %v809 = vadd.f32 %v786, 1.0
        %v810 = vadd.f32 %v788, 1.0
        %v811 = vadd.f32 %v790, 1.0
        %v812 = vadd.f32 %v792, 1.0
        %v813 = vadd.f32 %v794, 1.0
        %v814 = vadd.f32 %v796, 1.0
        %v815 = vadd.f32 %v798, 1.0
        %v816 = vadd.f32 %v800, 1.0
        %v817 = vrcp.pop %v801
        %v818 = vmul.f32 1.0, %v817
        %v819 = vrcp.pop %v802
        %v820 = vmul.f32 1.0, %v819
        %v821 = vrcp.pop %v803
        %v822 = vmul.f32 1.0, %v821
        %v823 = vrcp.pop %v804
        %v824 = vmul.f32 1.0, %v823
        %v825 = vrcp.pop %v805
        %v826 = vmul.f32 1.0, %v825
        %v827 = vrcp.pop %v806
        %v828 = vmul.f32 1.0, %v827
        %v829 = vrcp.pop %v807
        %v830 = vmul.f32 1.0, %v829
        %v831 = vrcp.pop %v808
        %v832 = vmul.f32 1.0, %v831
        %v833 = vrcp.pop %v809
        %v834 = vmul.f32 1.0, %v833
        %v835 = vrcp.pop %v810
        %v836 = vmul.f32 1.0, %v835
        %v837 = vrcp.pop %v811
        %v838 = vmul.f32 1.0, %v837
        %v839 = vrcp.pop %v812
        %v840 = vmul.f32 1.0, %v839
        %v841 = vrcp.pop %v813
        %v842 = vmul.f32 1.0, %v841
        %v843 = vrcp.pop %v814
        %v844 = vmul.f32 1.0, %v843
        %v845 = vrcp.pop %v815
        %v846 = vmul.f32 1.0, %v845
        %v847 = vrcp.pop %v816
        %v848 = vmul.f32 1.0, %v847
        %v849 = vxor.u32 %v595, 2147483648
        %v850 = vxor.u32 %v600, 2147483648
        %v851 = vxor.u32 %v605, 2147483648
        %v852 = vxor.u32 %v610, 2147483648
        %v853 = vxor.u32 %v615, 2147483648
        %v854 = vxor.u32 %v620, 2147483648
        %v855 = vxor.u32 %v625, 2147483648
        %v856 = vxor.u32 %v630, 2147483648
        %v857 = vxor.u32 %v635, 2147483648
        %v858 = vxor.u32 %v640, 2147483648
        %v859 = vxor.u32 %v645, 2147483648
        %v860 = vxor.u32 %v650, 2147483648
        %v861 = vxor.u32 %v655, 2147483648
        %v862 = vxor.u32 %v660, 2147483648
        %v863 = vxor.u32 %v665, 2147483648
        %v864 = vxor.u32 %v670, 2147483648
        %v865 = vmul.f32 %v849, 1.442695
        %v866 = vpow.pop %v865
        %v867 = vmul.f32 %v850, 1.442695
        %v868 = vpow.pop %v867
        %v869 = vmul.f32 %v851, 1.442695
        %v870 = vpow.pop %v869
        %v871 = vmul.f32 %v852, 1.442695
        %v872 = vpow.pop %v871
        %v873 = vmul.f32 %v853, 1.442695
        %v874 = vpow.pop %v873
        %v875 = vmul.f32 %v854, 1.442695
        %v876 = vpow.pop %v875
        %v877 = vmul.f32 %v855, 1.442695
        %v878 = vpow.pop %v877
        %v879 = vmul.f32 %v856, 1.442695
        %v880 = vpow.pop %v879
        %v881 = vmul.f32 %v857, 1.442695
        %v882 = vpow.pop %v881
        %v883 = vmul.f32 %v858, 1.442695
        %v884 = vpow.pop %v883
        %v885 = vmul.f32 %v859, 1.442695
        %v886 = vpow.pop %v885
        %v887 = vmul.f32 %v860, 1.442695
        %v888 = vpow.pop %v887
        %v889 = vmul.f32 %v861, 1.442695
        %v890 = vpow.pop %v889
        %v891 = vmul.f32 %v862, 1.442695
        %v892 = vpow.pop %v891
        %v893 = vmul.f32 %v863, 1.442695
        %v894 = vpow.pop %v893
        %v895 = vmul.f32 %v864, 1.442695
        %v896 = vpow.pop %v895
        %v897 = vadd.f32 %v866, 1.0
        %v898 = vadd.f32 %v868, 1.0
        %v899 = vadd.f32 %v870, 1.0
        %v900 = vadd.f32 %v872, 1.0
        %v901 = vadd.f32 %v874, 1.0
        %v902 = vadd.f32 %v876, 1.0
        %v903 = vadd.f32 %v878, 1.0
        %v904 = vadd.f32 %v880, 1.0
        %v905 = vadd.f32 %v882, 1.0
        %v906 = vadd.f32 %v884, 1.0
        %v907 = vadd.f32 %v886, 1.0
        %v908 = vadd.f32 %v888, 1.0
        %v909 = vadd.f32 %v890, 1.0
        %v910 = vadd.f32 %v892, 1.0
        %v911 = vadd.f32 %v894, 1.0
        %v912 = vadd.f32 %v896, 1.0
        %v913 = vrcp.pop %v897
        %v914 = vmul.f32 1.0, %v913
        %v915 = vrcp.pop %v898
        %v916 = vmul.f32 1.0, %v915
        %v917 = vrcp.pop %v899
        %v918 = vmul.f32 1.0, %v917
        %v919 = vrcp.pop %v900
        %v920 = vmul.f32 1.0, %v919
        %v921 = vrcp.pop %v901
        %v922 = vmul.f32 1.0, %v921
        %v923 = vrcp.pop %v902
        %v924 = vmul.f32 1.0, %v923
        %v925 = vrcp.pop %v903
        %v926 = vmul.f32 1.0, %v925
        %v927 = vrcp.pop %v904
        %v928 = vmul.f32 1.0, %v927
        %v929 = vrcp.pop %v905
        %v930 = vmul.f32 1.0, %v929
        %v931 = vrcp.pop %v906
        %v932 = vmul.f32 1.0, %v931
        %v933 = vrcp.pop %v907
        %v934 = vmul.f32 1.0, %v933
        %v935 = vrcp.pop %v908
        %v936 = vmul.f32 1.0, %v935
        %v937 = vrcp.pop %v909
        %v938 = vmul.f32 1.0, %v937
        %v939 = vrcp.pop %v910
        %v940 = vmul.f32 1.0, %v939
        %v941 = vrcp.pop %v911
        %v942 = vmul.f32 1.0, %v941
        %v943 = vrcp.pop %v912
        %v944 = vmul.f32 1.0, %v943
        %v945 = vld [vmem:[#allocation6] sm:$0xff]
        %v946 = vld [vmem:[#allocation6 + $0x8] sm:$0xff]
        %v947 = vld [vmem:[#allocation6 + $0x10] sm:$0xff]
        %v948 = vld [vmem:[#allocation6 + $0x18] sm:$0xff]
        %v949 = vld [vmem:[#allocation6 + $0x20] sm:$0xff]
        %v950 = vld [vmem:[#allocation6 + $0x28] sm:$0xff]
        %v951 = vld [vmem:[#allocation6 + $0x30] sm:$0xff]
        %v952 = vld [vmem:[#allocation6 + $0x38] sm:$0xff]
        %v953 = vld [vmem:[#allocation6 + $0x40] sm:$0xff]
        %v954 = vld [vmem:[#allocation6 + $0x48] sm:$0xff]
        %v955 = vld [vmem:[#allocation6 + $0x50] sm:$0xff]
        %v956 = vld [vmem:[#allocation6 + $0x58] sm:$0xff]
        %v957 = vld [vmem:[#allocation6 + $0x60] sm:$0xff]
        %v958 = vld [vmem:[#allocation6 + $0x68] sm:$0xff]
        %v959 = vld [vmem:[#allocation6 + $0x70] sm:$0xff]
        %v960 = vld [vmem:[#allocation6 + $0x78] sm:$0xff]
        %v961 = vmul.f32 %v914, %v336
        %v962 = vmul.f32 %v916, %v337
        %v963 = vmul.f32 %v918, %v338
        %v964 = vmul.f32 %v920, %v339
        %v965 = vmul.f32 %v922, %v340
        %v966 = vmul.f32 %v924, %v341
        %v967 = vmul.f32 %v926, %v342
        %v968 = vmul.f32 %v928, %v343
        %v969 = vmul.f32 %v930, %v344
        %v970 = vmul.f32 %v932, %v345
        %v971 = vmul.f32 %v934, %v346
        %v972 = vmul.f32 %v936, %v347
        %v973 = vmul.f32 %v938, %v348
        %v974 = vmul.f32 %v940, %v349
        %v975 = vmul.f32 %v942, %v350
        %v976 = vmul.f32 %v944, %v351
        %977 = vmatprep.subr.mxu0 0.0
        %978 = vmatpush1.msra.mxu0 %v976
        %979 = vmatprep.subr.mxu0 0.0
        %980 = vmatpush1.msra.mxu0 %v975
        %981 = vmatprep.subr.mxu0 0.0
        %982 = vmatpush1.msra.mxu0 %v974
        %983 = vmatprep.subr.mxu0 0.0
        %984 = vmatpush1.msra.mxu0 %v973
        %985 = vmatprep.subr.mxu0 0.0
        %986 = vmatpush1.msra.mxu0 %v972
        %987 = vmatprep.subr.mxu0 0.0
        %988 = vmatpush1.msra.mxu0 %v971
        %989 = vmatprep.subr.mxu0 0.0
        %990 = vmatpush1.msra.mxu0 %v970
        %991 = vmatprep.subr.mxu0 0.0
        %992 = vmatpush1.msra.mxu0 %v969
        %993 = vmatprep.subr.mxu0 0.0
        %994 = vmatpush1.msra.mxu0 %v968
        %995 = vmatprep.subr.mxu0 0.0
        %996 = vmatpush1.msra.mxu0 %v967
        %997 = vmatprep.subr.mxu0 0.0
        %998 = vmatpush1.msra.mxu0 %v966
        %999 = vmatprep.subr.mxu0 0.0
        %1000 = vmatpush1.msra.mxu0 %v965
        %1001 = vmatprep.subr.mxu0 0.0
        %1002 = vmatpush1.msra.mxu0 %v964
        %1003 = vmatprep.subr.mxu0 0.0
        %1004 = vmatpush1.msra.mxu0 %v963
        %1005 = vmatprep.subr.mxu0 0.0
        %1006 = vmatpush1.msra.mxu0 %v962
        %1007 = vmatprep.subr.mxu0 0.0
        %1008 = vmatpush1.msra.mxu0 %v961
        %1009 = vmatprep.subr.mxu0 0.0
        %1010 = vmatpush2.msra.mxu0 0.0
        %1011 = vmatprep.subr.mxu0 0.0
        %1012 = vmatpush2.msra.mxu0 0.0
        %1013 = vmatprep.subr.mxu0 0.0
        %1014 = vmatpush2.msra.mxu0 0.0
        %1015 = vmatprep.subr.mxu0 0.0
        %1016 = vmatpush2.msra.mxu0 0.0
        %1017 = vmatprep.subr.mxu0 0.0
        %1018 = vmatpush2.msra.mxu0 0.0
        %1019 = vmatprep.subr.mxu0 0.0
        %1020 = vmatpush2.msra.mxu0 0.0
        %1021 = vmatprep.subr.mxu0 0.0
        %1022 = vmatpush2.msra.mxu0 0.0
        %1023 = vmatprep.subr.mxu0 0.0
        %1024 = vmatpush2.msra.mxu0 0.0
        %1025 = vmatprep.subr.mxu0 0.0
        %1026 = vmatpush2.msra.mxu0 0.0
        %1027 = vmatprep.subr.mxu0 0.0
        %1028 = vmatpush2.msra.mxu0 0.0
        %1029 = vmatprep.subr.mxu0 0.0
        %1030 = vmatpush2.msra.mxu0 0.0
        %1031 = vmatprep.subr.mxu0 0.0
        %1032 = vmatpush2.msra.mxu0 0.0
        %1033 = vmatprep.subr.mxu0 0.0
        %1034 = vmatpush2.msra.mxu0 0.0
        %1035 = vmatprep.subr.mxu0 0.0
        %1036 = vmatpush2.msra.mxu0 0.0
        %1037 = vmatprep.subr.mxu0 0.0
        %1038 = vmatpush2.msra.mxu0 0.0
        %1039 = vmatprep.subr.mxu0 0.0
        %1040 = vmatpush2.msra.mxu0 0.0
        %1041 = vmatprep.mubr.f32.mxu0 0.0
        %1042 = vmatmul.mubr.f32.gmra.mxu0 %v945
        %v1043 = vpop.f32.mrf.mxu0
        %v1044 = vadd.f32 0.0, %v1043
        %v1045 = vpop.f32.mrf.mxu0
        %1046 = vmatprep.mubr.f32.mxu0 0.0
        %1047 = vmatmul.mubr.f32.gmra.mxu0 %v946
        %v1048 = vpop.f32.mrf.mxu0
        %v1049 = vadd.f32 0.0, %v1048
        %v1050 = vpop.f32.mrf.mxu0
        %1051 = vmatprep.mubr.f32.mxu0 0.0
        %1052 = vmatmul.mubr.f32.gmra.mxu0 %v947
        %v1053 = vpop.f32.mrf.mxu0
        %v1054 = vadd.f32 0.0, %v1053
        %v1055 = vpop.f32.mrf.mxu0
        %1056 = vmatprep.mubr.f32.mxu0 0.0
        %1057 = vmatmul.mubr.f32.gmra.mxu0 %v948
        %v1058 = vpop.f32.mrf.mxu0
        %v1059 = vadd.f32 0.0, %v1058
        %v1060 = vpop.f32.mrf.mxu0
        %1061 = vmatprep.mubr.f32.mxu0 0.0
        %1062 = vmatmul.mubr.f32.gmra.mxu0 %v949
        %v1063 = vpop.f32.mrf.mxu0
        %v1064 = vadd.f32 0.0, %v1063
        %v1065 = vpop.f32.mrf.mxu0
        %1066 = vmatprep.mubr.f32.mxu0 0.0
        %1067 = vmatmul.mubr.f32.gmra.mxu0 %v950
        %v1068 = vpop.f32.mrf.mxu0
        %v1069 = vadd.f32 0.0, %v1068
        %v1070 = vpop.f32.mrf.mxu0
        %1071 = vmatprep.mubr.f32.mxu0 0.0
        %1072 = vmatmul.mubr.f32.gmra.mxu0 %v951
        %v1073 = vpop.f32.mrf.mxu0
        %v1074 = vadd.f32 0.0, %v1073
        %v1075 = vpop.f32.mrf.mxu0
        %1076 = vmatprep.mubr.f32.mxu0 0.0
        %1077 = vmatmul.mubr.f32.gmra.mxu0 %v952
        %v1078 = vpop.f32.mrf.mxu0
        %v1079 = vadd.f32 0.0, %v1078
        %v1080 = vpop.f32.mrf.mxu0
        %1081 = vmatprep.mubr.f32.mxu0 0.0
        %1082 = vmatmul.mubr.f32.gmra.mxu0 %v953
        %v1083 = vpop.f32.mrf.mxu0
        %v1084 = vadd.f32 0.0, %v1083
        %v1085 = vpop.f32.mrf.mxu0
        %1086 = vmatprep.mubr.f32.mxu0 0.0
        %1087 = vmatmul.mubr.f32.gmra.mxu0 %v954
        %v1088 = vpop.f32.mrf.mxu0
        %v1089 = vadd.f32 0.0, %v1088
        %v1090 = vpop.f32.mrf.mxu0
        %1091 = vmatprep.mubr.f32.mxu0 0.0
        %1092 = vmatmul.mubr.f32.gmra.mxu0 %v955
        %v1093 = vpop.f32.mrf.mxu0
        %v1094 = vadd.f32 0.0, %v1093
        %v1095 = vpop.f32.mrf.mxu0
        %1096 = vmatprep.mubr.f32.mxu0 0.0
        %1097 = vmatmul.mubr.f32.gmra.mxu0 %v956
        %v1098 = vpop.f32.mrf.mxu0
        %v1099 = vadd.f32 0.0, %v1098
        %v1100 = vpop.f32.mrf.mxu0
        %1101 = vmatprep.mubr.f32.mxu0 0.0
        %1102 = vmatmul.mubr.f32.gmra.mxu0 %v957
        %v1103 = vpop.f32.mrf.mxu0
        %v1104 = vadd.f32 0.0, %v1103
        %v1105 = vpop.f32.mrf.mxu0
        %1106 = vmatprep.mubr.f32.mxu0 0.0
        %1107 = vmatmul.mubr.f32.gmra.mxu0 %v958
        %v1108 = vpop.f32.mrf.mxu0
        %v1109 = vadd.f32 0.0, %v1108
        %v1110 = vpop.f32.mrf.mxu0
        %1111 = vmatprep.mubr.f32.mxu0 0.0
        %1112 = vmatmul.mubr.f32.gmra.mxu0 %v959
        %v1113 = vpop.f32.mrf.mxu0
        %v1114 = vadd.f32 0.0, %v1113
        %v1115 = vpop.f32.mrf.mxu0
        %1116 = vmatprep.mubr.f32.mxu0 0.0
        %1117 = vmatmul.mubr.f32.gmra.mxu0 %v960
        %v1118 = vpop.f32.mrf.mxu0
        %v1119 = vadd.f32 0.0, %v1118
        %v1120 = vpop.f32.mrf.mxu0
        %1121 = vdwg.mxu0
        %v1122 = vadd.f32 %v675, %v1044
        %v1123 = vadd.f32 %v680, %v1049
        %v1124 = vadd.f32 %v685, %v1054
        %v1125 = vadd.f32 %v690, %v1059
        %v1126 = vadd.f32 %v695, %v1064
        %v1127 = vadd.f32 %v700, %v1069
        %v1128 = vadd.f32 %v705, %v1074
        %v1129 = vadd.f32 %v710, %v1079
        %v1130 = vadd.f32 %v715, %v1084
        %v1131 = vadd.f32 %v720, %v1089
        %v1132 = vadd.f32 %v725, %v1094
        %v1133 = vadd.f32 %v730, %v1099
        %v1134 = vadd.f32 %v735, %v1104
        %v1135 = vadd.f32 %v740, %v1109
        %v1136 = vadd.f32 %v745, %v1114
        %v1137 = vadd.f32 %v750, %v1119
        %v1138 = vtanh.pop %v1122
        %v1139 = vtanh.pop %v1123
        %v1140 = vtanh.pop %v1124
        %v1141 = vtanh.pop %v1125
        %v1142 = vtanh.pop %v1126
        %v1143 = vtanh.pop %v1127
        %v1144 = vtanh.pop %v1128
        %v1145 = vtanh.pop %v1129
        %v1146 = vtanh.pop %v1130
        %v1147 = vtanh.pop %v1131
        %v1148 = vtanh.pop %v1132
        %v1149 = vtanh.pop %v1133
        %v1150 = vtanh.pop %v1134
        %v1151 = vtanh.pop %v1135
        %v1152 = vtanh.pop %v1136
        %v1153 = vtanh.pop %v1137
        %v1154 = vsub.f32 1.0, %v818
        %v1155 = vsub.f32 1.0, %v820
        %v1156 = vsub.f32 1.0, %v822
        %v1157 = vsub.f32 1.0, %v824
        %v1158 = vsub.f32 1.0, %v826
        %v1159 = vsub.f32 1.0, %v828
        %v1160 = vsub.f32 1.0, %v830
        %v1161 = vsub.f32 1.0, %v832
        %v1162 = vsub.f32 1.0, %v834
        %v1163 = vsub.f32 1.0, %v836
        %v1164 = vsub.f32 1.0, %v838
        %v1165 = vsub.f32 1.0, %v840
        %v1166 = vsub.f32 1.0, %v842
        %v1167 = vsub.f32 1.0, %v844
        %v1168 = vsub.f32 1.0, %v846
        %v1169 = vsub.f32 1.0, %v848
        %v1170 = vmul.f32 %v1154, %v336
        %v1171 = vmul.f32 %v1155, %v337
        %v1172 = vmul.f32 %v1156, %v338
        %v1173 = vmul.f32 %v1157, %v339
        %v1174 = vmul.f32 %v1158, %v340
        %v1175 = vmul.f32 %v1159, %v341
        %v1176 = vmul.f32 %v1160, %v342
        %v1177 = vmul.f32 %v1161, %v343
        %v1178 = vmul.f32 %v1162, %v344
        %v1179 = vmul.f32 %v1163, %v345
        %v1180 = vmul.f32 %v1164, %v346
        %v1181 = vmul.f32 %v1165, %v347
        %v1182 = vmul.f32 %v1166, %v348
        %v1183 = vmul.f32 %v1167, %v349
        %v1184 = vmul.f32 %v1168, %v350
        %v1185 = vmul.f32 %v1169, %v351
        %v1186 = vmul.f32 %v818, %v1138
        %v1187 = vmul.f32 %v820, %v1139
        %v1188 = vmul.f32 %v822, %v1140
        %v1189 = vmul.f32 %v824, %v1141
        %v1190 = vmul.f32 %v826, %v1142
        %v1191 = vmul.f32 %v828, %v1143
        %v1192 = vmul.f32 %v830, %v1144
        %v1193 = vmul.f32 %v832, %v1145
        %v1194 = vmul.f32 %v834, %v1146
        %v1195 = vmul.f32 %v836, %v1147
        %v1196 = vmul.f32 %v838, %v1148
        %v1197 = vmul.f32 %v840, %v1149
        %v1198 = vmul.f32 %v842, %v1150
        %v1199 = vmul.f32 %v844, %v1151
        %v1200 = vmul.f32 %v846, %v1152
        %v1201 = vmul.f32 %v848, %v1153
        %v1202 = vadd.f32 %v1170, %v1186
        %v1203 = vadd.f32 %v1171, %v1187
        %v1204 = vadd.f32 %v1172, %v1188
        %v1205 = vadd.f32 %v1173, %v1189
        %v1206 = vadd.f32 %v1174, %v1190
        %v1207 = vadd.f32 %v1175, %v1191
        %v1208 = vadd.f32 %v1176, %v1192
        %v1209 = vadd.f32 %v1177, %v1193
        %v1210 = vadd.f32 %v1178, %v1194
        %v1211 = vadd.f32 %v1179, %v1195
        %v1212 = vadd.f32 %v1180, %v1196
        %v1213 = vadd.f32 %v1181, %v1197
        %v1214 = vadd.f32 %v1182, %v1198
        %v1215 = vadd.f32 %v1183, %v1199
        %v1216 = vadd.f32 %v1184, %v1200
        %v1217 = vadd.f32 %v1185, %v1201
        %1218 = vst [vmem:[#allocation2] sm:$0xff] %v1202
        %1219 = vst [vmem:[#allocation2 + $0x8] sm:$0xff] %v1203
        %1220 = vst [vmem:[#allocation2 + $0x10] sm:$0xff] %v1204
        %1221 = vst [vmem:[#allocation2 + $0x18] sm:$0xff] %v1205
        %1222 = vst [vmem:[#allocation2 + $0x20] sm:$0xff] %v1206
        %1223 = vst [vmem:[#allocation2 + $0x28] sm:$0xff] %v1207
        %1224 = vst [vmem:[#allocation2 + $0x30] sm:$0xff] %v1208
        %1225 = vst [vmem:[#allocation2 + $0x38] sm:$0xff] %v1209
        %1226 = vst [vmem:[#allocation2 + $0x40] sm:$0xff] %v1210
        %1227 = vst [vmem:[#allocation2 + $0x48] sm:$0xff] %v1211
        %1228 = vst [vmem:[#allocation2 + $0x50] sm:$0xff] %v1212
        %1229 = vst [vmem:[#allocation2 + $0x58] sm:$0xff] %v1213
        %1230 = vst [vmem:[#allocation2 + $0x60] sm:$0xff] %v1214
        %1231 = vst [vmem:[#allocation2 + $0x68] sm:$0xff] %v1215
        %1232 = vst [vmem:[#allocation2 + $0x70] sm:$0xff] %v1216
        %1233 = vst [vmem:[#allocation2 + $0x78] sm:$0xff] %v1217
        %v1234 = vld [vmem:[%s272] sm:$0xf]
        %v1235 = vld [vmem:[%s272 + $0x4] sm:$0xf]
        %v1236 = vld [vmem:[%s272 + $0x8] sm:$0xf]
        %v1237 = vld [vmem:[%s272 + $0xc] sm:$0xf]
        %v1238 = vld [vmem:[%s272 + $0x10] sm:$0xf]
        %v1239 = vld [vmem:[%s272 + $0x14] sm:$0xf]
        %v1240 = vld [vmem:[%s272 + $0x18] sm:$0xf]
        %v1241 = vld [vmem:[%s272 + $0x1c] sm:$0xf]
        %v1242 = vld [vmem:[%s272 + $0x20] sm:$0xf]
        %v1243 = vld [vmem:[%s272 + $0x24] sm:$0xf]
        %v1244 = vld [vmem:[%s272 + $0x28] sm:$0xf]
        %v1245 = vld [vmem:[%s272 + $0x2c] sm:$0xf]
        %v1246 = vld [vmem:[%s272 + $0x30] sm:$0xf]
        %v1247 = vld [vmem:[%s272 + $0x34] sm:$0xf]
        %v1248 = vld [vmem:[%s272 + $0x38] sm:$0xf]
        %v1249 = vld [vmem:[%s272 + $0x3c] sm:$0xf]
        %v1250 = vpack.c.bf16 %v1203, %v1202
        %v1251 = vpack.c.bf16 %v1205, %v1204
        %v1252 = vpack.c.bf16 %v1207, %v1206
        %v1253 = vpack.c.bf16 %v1209, %v1208
        %v1254 = vpack.c.bf16 %v1211, %v1210
        %v1255 = vpack.c.bf16 %v1213, %v1212
        %v1256 = vpack.c.bf16 %v1215, %v1214
        %v1257 = vpack.c.bf16 %v1217, %v1216
        %v1274 = vunpack.c.l.b16 %v1234
        %v1275 = vunpack.c.l.b16 %v1235
        %v1276 = vunpack.c.l.b16 %v1236
        %v1277 = vunpack.c.l.b16 %v1237
        %v1278 = vunpack.c.l.b16 %v1238
        %v1279 = vunpack.c.l.b16 %v1239
        %v1280 = vunpack.c.l.b16 %v1240
        %v1281 = vunpack.c.l.b16 %v1241
        %v1282 = vunpack.c.l.b16 %v1242
        %v1283 = vunpack.c.l.b16 %v1243
        %v1284 = vunpack.c.l.b16 %v1244
        %v1285 = vunpack.c.l.b16 %v1245
        %v1286 = vunpack.c.l.b16 %v1246
        %v1287 = vunpack.c.l.b16 %v1247
        %v1288 = vunpack.c.l.b16 %v1248
        %v1289 = vunpack.c.l.b16 %v1249
        %v1290 = vpack.c.b16 %v1275, %v1274
        %v1291 = vpack.c.b16 %v1277, %v1276
        %v1292 = vpack.c.b16 %v1279, %v1278
        %v1293 = vpack.c.b16 %v1281, %v1280
        %v1294 = vpack.c.b16 %v1283, %v1282
        %v1295 = vpack.c.b16 %v1285, %v1284
        %v1296 = vpack.c.b16 %v1287, %v1286
        %v1297 = vpack.c.b16 %v1289, %v1288
        %1306 = vmatprep.subr.bf16.mxu0 0
        %1307 = vmatpush1.bf16.msra.mxu0 %v1257
        %1308 = vmatprep.subr.bf16.mxu0 0
        %1309 = vmatpush1.bf16.msra.mxu0 %v1256
        %1310 = vmatprep.subr.bf16.mxu0 0
        %1311 = vmatpush1.bf16.msra.mxu0 %v1255
        %1312 = vmatprep.subr.bf16.mxu0 0
        %1313 = vmatpush1.bf16.msra.mxu0 %v1254
        %1314 = vmatprep.subr.bf16.mxu0 0
        %1315 = vmatpush1.bf16.msra.mxu0 %v1253
        %1316 = vmatprep.subr.bf16.mxu0 0
        %1317 = vmatpush1.bf16.msra.mxu0 %v1252
        %1318 = vmatprep.subr.bf16.mxu0 0
        %1319 = vmatpush1.bf16.msra.mxu0 %v1251
        %1320 = vmatprep.subr.bf16.mxu0 0
        %1321 = vmatpush1.bf16.msra.mxu0 %v1250
        %1322 = vmatprep.subr.bf16.mxu0 0
        %1323 = vmatpush2.bf16.msra.mxu0 0
        %1324 = vmatprep.subr.bf16.mxu0 0
        %1325 = vmatpush2.bf16.msra.mxu0 0
        %1326 = vmatprep.subr.bf16.mxu0 0
        %1327 = vmatpush2.bf16.msra.mxu0 0
        %1328 = vmatprep.subr.bf16.mxu0 0
        %1329 = vmatpush2.bf16.msra.mxu0 0
        %1330 = vmatprep.subr.bf16.mxu0 0
        %1331 = vmatpush2.bf16.msra.mxu0 0
        %1332 = vmatprep.subr.bf16.mxu0 0
        %1333 = vmatpush2.bf16.msra.mxu0 0
        %1334 = vmatprep.subr.bf16.mxu0 0
        %1335 = vmatpush2.bf16.msra.mxu0 0
        %1336 = vmatprep.subr.bf16.mxu0 0
        %1337 = vmatpush2.bf16.msra.mxu0 0
        %1338 = vmatprep.mubr.bf16.mxu0 0
        %1339 = vmatmul.mubr.bf16.gmra.mxu0 %v1290
        %v1340 = vpop.f32.mrf.mxu0
        %v1341 = vadd.f32 0.0, %v1340
        %v1342 = vpop.f32.mrf.mxu0
        %v1343 = vpop.f32.mrf.mxu0
        %v1344 = vadd.f32 0.0, %v1343
        %v1345 = vpop.f32.mrf.mxu0
        %1346 = vmatprep.mubr.bf16.mxu0 0
        %1347 = vmatmul.mubr.bf16.gmra.mxu0 %v1291
        %v1348 = vpop.f32.mrf.mxu0
        %v1349 = vadd.f32 0.0, %v1348
        %v1350 = vpop.f32.mrf.mxu0
        %v1351 = vpop.f32.mrf.mxu0
        %v1352 = vadd.f32 0.0, %v1351
        %v1353 = vpop.f32.mrf.mxu0
        %1354 = vmatprep.mubr.bf16.mxu0 0
        %1355 = vmatmul.mubr.bf16.gmra.mxu0 %v1292
        %v1356 = vpop.f32.mrf.mxu0
        %v1357 = vadd.f32 0.0, %v1356
        %v1358 = vpop.f32.mrf.mxu0
        %v1359 = vpop.f32.mrf.mxu0
        %v1360 = vadd.f32 0.0, %v1359
        %v1361 = vpop.f32.mrf.mxu0
        %1362 = vmatprep.mubr.bf16.mxu0 0
        %1363 = vmatmul.mubr.bf16.gmra.mxu0 %v1293
        %v1364 = vpop.f32.mrf.mxu0
        %v1365 = vadd.f32 0.0, %v1364
        %v1366 = vpop.f32.mrf.mxu0
        %v1367 = vpop.f32.mrf.mxu0
        %v1368 = vadd.f32 0.0, %v1367
        %v1369 = vpop.f32.mrf.mxu0
        %1370 = vmatprep.mubr.bf16.mxu0 0
        %1371 = vmatmul.mubr.bf16.gmra.mxu0 %v1294
        %v1372 = vpop.f32.mrf.mxu0
        %v1373 = vadd.f32 0.0, %v1372
        %v1374 = vpop.f32.mrf.mxu0
        %v1375 = vpop.f32.mrf.mxu0
        %v1376 = vadd.f32 0.0, %v1375
        %v1377 = vpop.f32.mrf.mxu0
        %1378 = vmatprep.mubr.bf16.mxu0 0
        %1379 = vmatmul.mubr.bf16.gmra.mxu0 %v1295
        %v1380 = vpop.f32.mrf.mxu0
        %v1381 = vadd.f32 0.0, %v1380
        %v1382 = vpop.f32.mrf.mxu0
        %v1383 = vpop.f32.mrf.mxu0
        %v1384 = vadd.f32 0.0, %v1383
        %v1385 = vpop.f32.mrf.mxu0
        %1386 = vmatprep.mubr.bf16.mxu0 0
        %1387 = vmatmul.mubr.bf16.gmra.mxu0 %v1296
        %v1388 = vpop.f32.mrf.mxu0
        %v1389 = vadd.f32 0.0, %v1388
        %v1390 = vpop.f32.mrf.mxu0
        %v1391 = vpop.f32.mrf.mxu0
        %v1392 = vadd.f32 0.0, %v1391
        %v1393 = vpop.f32.mrf.mxu0
        %1394 = vmatprep.mubr.bf16.mxu0 0
        %1395 = vmatmul.mubr.bf16.gmra.mxu0 %v1297
        %v1396 = vpop.f32.mrf.mxu0
        %v1397 = vadd.f32 0.0, %v1396
        %v1398 = vpop.f32.mrf.mxu0
        %v1399 = vpop.f32.mrf.mxu0
        %v1400 = vadd.f32 0.0, %v1399
        %v1401 = vpop.f32.mrf.mxu0
        %1402 = vdwg.mxu0
        %v1403 = vpack.c.bf16 %v1344, %v1341
        %v1404 = vpack.c.bf16 %v1352, %v1349
        %v1405 = vpack.c.bf16 %v1360, %v1357
        %v1406 = vpack.c.bf16 %v1368, %v1365
        %v1407 = vpack.c.bf16 %v1376, %v1373
        %v1408 = vpack.c.bf16 %v1384, %v1381
        %v1409 = vpack.c.bf16 %v1392, %v1389
        %v1410 = vpack.c.bf16 %v1400, %v1397
        %v1419 = vunpack.c.l.b16 %v1403
        %v1420 = vunpack.c.h.b16 %v1403
        %v1421 = vunpack.c.l.b16 %v1404
        %v1422 = vunpack.c.h.b16 %v1404
        %v1423 = vunpack.c.l.b16 %v1405
        %v1424 = vunpack.c.h.b16 %v1405
        %v1425 = vunpack.c.l.b16 %v1406
        %v1426 = vunpack.c.h.b16 %v1406
        %v1427 = vunpack.c.l.b16 %v1407
        %v1428 = vunpack.c.h.b16 %v1407
        %v1429 = vunpack.c.l.b16 %v1408
        %v1430 = vunpack.c.h.b16 %v1408
        %v1431 = vunpack.c.l.b16 %v1409
        %v1432 = vunpack.c.h.b16 %v1409
        %v1433 = vunpack.c.l.b16 %v1410
        %v1434 = vunpack.c.h.b16 %v1410
        %v1435 = vpack.c.b16 %v1419, %v1419
        %v1436 = vpack.c.b16 %v1420, %v1420
        %v1437 = vpack.c.b16 %v1421, %v1421
        %v1438 = vpack.c.b16 %v1422, %v1422
        %v1439 = vpack.c.b16 %v1423, %v1423
        %v1440 = vpack.c.b16 %v1424, %v1424
        %v1441 = vpack.c.b16 %v1425, %v1425
        %v1442 = vpack.c.b16 %v1426, %v1426
        %v1443 = vpack.c.b16 %v1427, %v1427
        %v1444 = vpack.c.b16 %v1428, %v1428
        %v1445 = vpack.c.b16 %v1429, %v1429
        %v1446 = vpack.c.b16 %v1430, %v1430
        %v1447 = vpack.c.b16 %v1431, %v1431
        %v1448 = vpack.c.b16 %v1432, %v1432
        %v1449 = vpack.c.b16 %v1433, %v1433
        %v1450 = vpack.c.b16 %v1434, %v1434
        %1467 = vst [vmem:[%s298] sm:$0xf] %v1435
        %1468 = vst [vmem:[%s298 + $0x4] sm:$0xf] %v1436
        %1469 = vst [vmem:[%s298 + $0x8] sm:$0xf] %v1437
        %1470 = vst [vmem:[%s298 + $0xc] sm:$0xf] %v1438
        %1471 = vst [vmem:[%s298 + $0x10] sm:$0xf] %v1439
        %1472 = vst [vmem:[%s298 + $0x14] sm:$0xf] %v1440
        %1473 = vst [vmem:[%s298 + $0x18] sm:$0xf] %v1441
        %1474 = vst [vmem:[%s298 + $0x1c] sm:$0xf] %v1442
        %1475 = vst [vmem:[%s298 + $0x20] sm:$0xf] %v1443
        %1476 = vst [vmem:[%s298 + $0x24] sm:$0xf] %v1444
        %1477 = vst [vmem:[%s298 + $0x28] sm:$0xf] %v1445
        %1478 = vst [vmem:[%s298 + $0x2c] sm:$0xf] %v1446
        %1479 = vst [vmem:[%s298 + $0x30] sm:$0xf] %v1447
        %1480 = vst [vmem:[%s298 + $0x34] sm:$0xf] %v1448
        %1481 = vst [vmem:[%s298 + $0x38] sm:$0xf] %v1449
        %1482 = vst [vmem:[%s298 + $0x3c] sm:$0xf] %v1450
        %s1483 = sand.u32 %s140, 1
        %s1484 = scalar_lea.sflag [#allocation5], %s1483
        %s1485 = sand.u32 %s140, 1
        %s1486 = smul.addr %s1485, 64
        %s1487 = scalar_lea.vmem [#allocation12], %s1486
        // Predicated region
        $region65: #{tpu_custom_call.1} parent=39 // pred_check
          %p1488 = pneg %p150
        $region66: #{tpu_custom_call.1} parent=39 // pred_check_branch
          %1490 = sbr.rel (%p1488) target = $region68
        $region67: #{tpu_custom_call.1} parent=39 // pred_region
          %s1492 = ssub.s32 1024, 1024
          %1493 = vsyncadd %s1484, %s1492
          %s1494 = smul.addr %s22, 16
          %s1495 = smul.addr %s1494, 64
          %s1496 = scalar_lea.hbm %s5, %s1495
          %s1497 = sshll.u32 %s1487, 4
          %s1498 = int_to_ptr.vmem [resolvable:$true] %s1497
          %1503 = dma.vmem_to_hbm [thread:$0]  %s1498, 1024, %s1496, %s1484, 64, 64, 4
        $region68: #{tpu_custom_call.1} parent=39 // pred_fallthru
          _
      $region40: #{tpu_custom_call.1} parent=5 // pred_fallthru
        _
      %p1504 = scmp.le.s32.totalorder 2, %s17
      // Predicated region
      $region69: #{tpu_custom_call.1} parent=5 // pred_check
        %p1505 = pneg %p1504
      $region70: #{tpu_custom_call.1} parent=5 // pred_check_branch
        %1507 = sbr.rel (%p1505) target = $region72
      $region71: #{tpu_custom_call.1} parent=5 // pred_region
        %s1508 = ssub.s32 %s17, 2
        // Predicated region
        $region73: #{tpu_custom_call.1} parent=71 // pred_check
          %p1509 = pneg %p156
        $region74: #{tpu_custom_call.1} parent=71 // pred_check_branch
          %1511 = sbr.rel (%p1509) target = $region76
        $region75: #{tpu_custom_call.1} parent=71 // pred_region
          %s1512 = sand.u32 %s141, 1
          %s1513 = scalar_lea.sflag [#allocation5], %s1512
          %s1514 = sand.u32 %s141, 1
          %s1515 = smul.addr %s1514, 64
          %s1516 = scalar_lea.vmem [#allocation12], %s1515
          %1517 = dma.done %s1513, 1024
        $region76: #{tpu_custom_call.1} parent=71 // pred_fallthru
          _
      $region72: #{tpu_custom_call.1} parent=5 // pred_fallthru
        _
    $region6: #{tpu_custom_call.1} parent=1 // loop_footer
      %s21 = sadd.s32 1, %s17
    $region7: #{tpu_custom_call.1} parent=1 // loop_footer_branch
      %16 = sbr.rel target = $region3
    $region8: #{tpu_custom_call.1} parent=1 // loop_exit
      _
    %1518 = vsyncpa [#allocation4], 1
    %s1519 = scalar_lea.sflag [#allocation4], 1
    %1520 = vsyncpa %s1519, 1
    %1521 = vsyncpa [#allocation7], 1
    %1522 = vsyncpa [#allocation10], 1
    %1523 = vsyncpa [#allocation5], 1
    %s1524 = scalar_lea.sflag [#allocation5], 1
    %1525 = vsyncpa %s1524, 1

</llo_original>
